<compile_context>
chip_gen: v7x
topology: tpu7x:2x2x1
jax: 0.10.0
libtpu: 0.0.40
codegen_flags: <defaults>
</compile_context>

<pallas_src>
import functools

import numpy as np
import jax
import jax.numpy as jnp
from jax import lax
from jax.experimental import pallas as pl
from jax.experimental.pallas import tpu as pltpu

KSIZE = 7
PAD = 3


def _cbam_kernel(x_ref, wfct_ref, bfc_ref, hmask_ref, wsp_ref, o_ref,
                 pm_ref, px_ref, *, W):
    Bt, C, HW = x_ref.shape
    maxoff = PAD * W + PAD                       # largest |flat offset| of any tap

    x = x_ref[...].astype(jnp.float32)           # (Bt, C, HW)

    # ---- Channel attention: global mean over HW -> 1x1 conv -> sigmoid -------
    # One (Bt,C) x (C,C) matmul instead of Bt replicated (C,C)x(C,1) matvecs.
    pooled = jnp.mean(x, axis=2)                                   # (Bt, C)
    logits = jnp.dot(pooled, wfct_ref[...].astype(jnp.float32),
                     preferred_element_type=jnp.float32)           # (Bt, C)
    logits = logits + bfc_ref[...]                                 # + bias (1, C)
    scale = jax.nn.sigmoid(logits)                                 # (Bt, C)
    ca = x * scale[:, :, None]                                     # (Bt, C, HW)

    # ---- Spatial attention: mean/max over C -> 7x7 conv (pad 3) -> sigmoid ----
    # All intermediates are 2-D: Bt packed into sublanes, HW in lanes.
    mean_c = jnp.mean(ca, axis=1)                                  # (Bt, HW)
    max_c = jnp.max(ca, axis=1)                                    # (Bt, HW)

    # Zero-padded flat maps in persistent VMEM scratch.  A tap (dy, dx) reads
    # the static lane window starting at maxoff + dy*W + dx; vertically
    # out-of-range taps land in the zero pad, horizontal row-wrap is removed
    # by the precomputed per-dx lane masks.
    pm_ref[...] = jnp.zeros_like(pm_ref)
    px_ref[...] = jnp.zeros_like(px_ref)
    pm_ref[:, maxoff:maxoff + HW] = mean_c
    px_ref[:, maxoff:maxoff + HW] = max_c

    # Hoist all 2x49 tap weights (SMEM scalar reads) out of the MAC loop.
    wm = [wsp_ref[0, t] for t in range(KSIZE * KSIZE)]             # mean-channel taps
    wx = [wsp_ref[1, t] for t in range(KSIZE * KSIZE)]             # max-channel taps

    acc0 = jnp.zeros((Bt, HW), jnp.float32)
    acc1 = jnp.zeros((Bt, HW), jnp.float32)
    for kx in range(KSIZE):                                        # column groups
        dx = kx - PAD
        inner_m = jnp.zeros((Bt, HW), jnp.float32)
        inner_x = jnp.zeros((Bt, HW), jnp.float32)
        for ky in range(KSIZE):                                    # row taps
            dy = ky - PAD
            start = maxoff + dy * W + dx
            t = ky * KSIZE + kx
            inner_m = inner_m + wm[t] * pm_ref[:, start:start + HW]
            inner_x = inner_x + wx[t] * px_ref[:, start:start + HW]
        comb = inner_m + inner_x
        if dx != 0:
            comb = comb * hmask_ref[kx:kx + 1, :]   # one mask apply per kx group
        if kx % 2 == 0:
            acc0 = acc0 + comb
        else:
            acc1 = acc1 + comb

    sp_att = jax.nn.sigmoid(acc0 + acc1)                           # (Bt, HW)
    o_ref[...] = (ca * sp_att[:, None, :]).astype(o_ref.dtype)     # (Bt, C, HW)


def _pick_batch_tile(B, per_image_bytes, *, target_block_bytes=2 << 20):
    """Batch tile: a divisor of B bounded by target_block_bytes, preferring
    (a) >= 2 grid steps (so v7x megacore can shard the batch axis) and
    (b) a multiple of 8 (f32 sublane packing in the spatial-attention path)."""
    divisors = [d for d in range(1, B + 1) if B % d == 0]
    fitting = [d for d in divisors if d * per_image_bytes <= target_block_bytes]
    if not fitting:
        fitting = [1]
    multi_step = [d for d in fitting if B // d >= 2] or fitting
    sublane_full = [d for d in multi_step if d % 8 == 0]
    cands = sublane_full or multi_step
    return max(cands)


def cbam_pallas(x, w_fc, b_fc, w_sp):
    B, C, H, W = x.shape
    HW = H * W
    maxoff = PAD * W + PAD

    # Lane-dense activation layout (H, W) -> HW, done wrapper-side.
    xr = x.reshape(B, C, HW)
    # TODO(synk): if H*W is not a multiple of 128 the big output store becomes
    # masked partial stores; wrapper-side lane padding of HW would fix that.

    # Small parameters prepared wrapper-side (all f32):
    #   * FC weight pre-transposed so the kernel computes pooled @ w_fc.T.
    #   * bias as a lane-dense (1, C) row.
    #   * 7x7 taps flattened to (2, 49) for cheap SMEM scalar reads.
    #   * per-dx horizontal wrap masks (7, HW), computed once, not per step.
    wfct = jnp.asarray(w_fc, jnp.float32).T
    bfc_row = jnp.asarray(b_fc, jnp.float32).reshape(1, C)
    wsp_flat = jnp.asarray(w_sp, jnp.float32).reshape(2, KSIZE * KSIZE)
    col = jnp.arange(HW, dtype=jnp.int32) % W
    hmask = jnp.stack(
        [(col + (kx - PAD) >= 0) & (col + (kx - PAD) < W) for kx in range(KSIZE)],
        axis=0).astype(jnp.float32)                                # (7, HW)

    bt = _pick_batch_tile(B, C * HW * x.dtype.itemsize)
    grid = (B // bt,)

    # Honest per-step VMEM estimate: double-buffered in/out blocks + f32
    # working copies of x and ca + padded maps/masks + slack.
    raw_block = bt * C * HW * x.dtype.itemsize
    f32_block = bt * C * HW * 4
    est_vmem = (4 * raw_block + 2 * f32_block
                + 2 * bt * (HW + 2 * maxoff) * 4 + (2 << 20))
    vmem_limit = int(min(48 << 20, max(24 << 20, est_vmem)))

    kernel = functools.partial(_cbam_kernel, W=W)
    out = pl.pallas_call(
        kernel,
        out_shape=jax.ShapeDtypeStruct((B, C, HW), x.dtype),
        grid=grid,
        in_specs=[
            pl.BlockSpec((bt, C, HW), lambda b: (b, 0, 0)),
            pl.BlockSpec((C, C), lambda b: (0, 0)),
            pl.BlockSpec((1, C), lambda b: (0, 0)),
            pl.BlockSpec((KSIZE, HW), lambda b: (0, 0)),
            pl.BlockSpec(memory_space=pltpu.MemorySpace.SMEM),
        ],
        out_specs=pl.BlockSpec((bt, C, HW), lambda b: (b, 0, 0)),
        scratch_shapes=[
            pltpu.VMEM((bt, HW + 2 * maxoff), jnp.float32),
            pltpu.VMEM((bt, HW + 2 * maxoff), jnp.float32),
        ],
        compiler_params=pltpu.CompilerParams(
            dimension_semantics=("parallel",),
            vmem_limit_bytes=vmem_limit),
    )(xr, wfct, bfc_row, hmask, wsp_flat)
    return out.reshape(B, C, H, W)


def cbam_ref(x, w_fc, b_fc, w_sp):
    """Pure-JAX reference mirroring the PyTorch CBAM forward."""
    pooled = jnp.mean(x, axis=(2, 3), keepdims=True)                    # (B,C,1,1)
    logits = jnp.einsum('oc,bcij->boij', w_fc, pooled) + b_fc.reshape(1, -1, 1, 1)
    ca = x * jax.nn.sigmoid(logits)
    mean_c = jnp.mean(ca, axis=1, keepdims=True)
    max_c = jnp.max(ca, axis=1, keepdims=True)
    cat = jnp.concatenate([mean_c, max_c], axis=1)                      # (B,2,H,W)
    conv = lax.conv_general_dilated(
        cat, w_sp[None], window_strides=(1, 1),
        padding=((PAD, PAD), (PAD, PAD)),
        dimension_numbers=('NCHW', 'OIHW', 'NCHW'))
    return ca * jax.nn.sigmoid(conv)


if __name__ == "__main__":
    key = jax.random.PRNGKey(0)
    k1, k2, k3, k4 = jax.random.split(key, 4)

    B, C, H, W = 2, 4, 16, 16
    x = jax.random.normal(k1, (B, C, H, W), jnp.float32)
    # ChannelAttention.fc: Conv2d(C, C, 1, bias=True) -> weight (C, C), bias (C, 1)
    w_fc = jax.random.normal(k2, (C, C), jnp.float32) * 0.2
    b_fc = jax.random.normal(k3, (C, 1), jnp.float32) * 0.1
    # SpatialAttention.cv1: Conv2d(2, 1, 7, padding=3, bias=False) -> weight (2, 7, 7)
    w_sp = jax.random.normal(k4, (2, KSIZE, KSIZE), jnp.float32) * 0.1

    out = jax.jit(cbam_pallas)(x, w_fc, b_fc, w_sp)
    jax.block_until_ready(out)

    ref = cbam_ref(x, w_fc, b_fc, w_sp)
    err = np.max(np.abs(np.asarray(out) - np.asarray(ref)))
    assert np.allclose(np.asarray(out), np.asarray(ref), rtol=1e-4, atol=1e-5), \
        f"mismatch vs reference, max abs err = {err}"

    print("KERNEL_OK")
</pallas_src>

<mosaic_0001>
module attributes {stable_mosaic.version = 11 : i64} {
  func.func @_cbam_kernel(%arg0: i32, %arg1: memref<1x4x256xf32, #tpu.memory_space<vmem>>, %arg2: memref<4x4xf32, #tpu.memory_space<vmem>>, %arg3: memref<1x4xf32, #tpu.memory_space<vmem>>, %arg4: memref<7x256xf32, #tpu.memory_space<vmem>>, %arg5: memref<2x49xf32, #tpu.memory_space<smem>>, %arg6: memref<1x4x256xf32, #tpu.memory_space<vmem>>, %arg7: memref<1x358xf32, #tpu.memory_space<vmem>>, %arg8: memref<1x358xf32, #tpu.memory_space<vmem>>) attributes {dimension_semantics = [#tpu.dimension_semantics<parallel>], iteration_bounds = array<i64: 2>, scalar_prefetch = 0 : i64, scratch_operands = 2 : i64, tpu.core_type = #tpu.core_type<tc>, window_params = [{transform_indices = @transform_0, window_bounds = array<i64: 1, 4, 256>}, {pipeline_mode = #tpu.pipeline_mode<synchronous>, transform_indices = @transform_1, window_bounds = array<i64: 4, 4>}, {pipeline_mode = #tpu.pipeline_mode<synchronous>, transform_indices = @transform_2, window_bounds = array<i64: 1, 4>}, {pipeline_mode = #tpu.pipeline_mode<synchronous>, transform_indices = @transform_3, window_bounds = array<i64: 7, 256>}, {transform_indices = @transform_4, window_bounds = array<i64: 2, 49>}, {transform_indices = @transform_5, window_bounds = array<i64: 1, 4, 256>}]} {
    %c0 = arith.constant 0 : index
    %c0_0 = arith.constant 0 : index
    %c0_1 = arith.constant 0 : index
    %0 = vector.load %arg1[%c0, %c0_0, %c0_1] : memref<1x4x256xf32, #tpu.memory_space<vmem>>, vector<1x4x256xf32>
    %cst = arith.constant dense<0.000000e+00> : vector<1x4xf32>
    %1 = vector.multi_reduction <add>, %0, %cst [2] : vector<1x4x256xf32> to vector<1x4xf32>
    %cst_2 = arith.constant 2.560000e+02 : f32
    %2 = vector.broadcast %cst_2 : f32 to vector<1x4xf32>
    %3 = arith.divf %1, %2 : vector<1x4xf32>
    %c0_3 = arith.constant 0 : index
    %c0_4 = arith.constant 0 : index
    %4 = vector.load %arg2[%c0_3, %c0_4] : memref<4x4xf32, #tpu.memory_space<vmem>>, vector<4x4xf32>
    %cst_5 = arith.constant dense<0.000000e+00> : vector<1x4xf32>
    %5 = tpu.matmul %3, %4, %cst_5 {dimension_numbers = #tpu.dot_dimension_numbers<[1], [0], [0], [1], [0, 0, 1, 1], [], []>} : vector<1x4xf32>, vector<4x4xf32>, vector<1x4xf32> -> vector<1x4xf32>
    %c0_6 = arith.constant 0 : index
    %c0_7 = arith.constant 0 : index
    %6 = vector.load %arg3[%c0_6, %c0_7] : memref<1x4xf32, #tpu.memory_space<vmem>>, vector<1x4xf32>
    %7 = arith.addf %5, %6 : vector<1x4xf32>
    %8 = arith.negf %7 : vector<1x4xf32>
    %9 = math.exp %8 : vector<1x4xf32>
    %cst_8 = arith.constant 1.000000e+00 : f32
    %10 = vector.broadcast %cst_8 : f32 to vector<1x4xf32>
    %11 = arith.addf %10, %9 : vector<1x4xf32>
    %12 = arith.divf %10, %11 : vector<1x4xf32>
    %13 = vector.shape_cast %12 : vector<1x4xf32> to vector<1x4x1xf32>
    %14 = vector.broadcast %13 : vector<1x4x1xf32> to vector<1x4x256xf32>
    %15 = arith.mulf %0, %14 : vector<1x4x256xf32>
    %cst_9 = arith.constant dense<0.000000e+00> : vector<1x256xf32>
    %16 = vector.multi_reduction <add>, %15, %cst_9 [1] : vector<1x4x256xf32> to vector<1x256xf32>
    %cst_10 = arith.constant 4.000000e+00 : f32
    %17 = vector.broadcast %cst_10 : f32 to vector<1x256xf32>
    %18 = arith.divf %16, %17 : vector<1x256xf32>
    %cst_11 = arith.constant dense<0xFF800000> : vector<1x256xf32>
    %19 = vector.multi_reduction <maximumf>, %15, %cst_11 [1] : vector<1x4x256xf32> to vector<1x256xf32>
    %cst_12 = arith.constant 0.000000e+00 : f32
    %20 = vector.broadcast %cst_12 : f32 to vector<1x358xf32>
    %c0_13 = arith.constant 0 : index
    %c0_14 = arith.constant 0 : index
    %21 = vector.load %arg7[%c0_13, %c0_14] : memref<1x358xf32, #tpu.memory_space<vmem>>, vector<1x358xf32>
    tpu.vector_store %arg7[%c0_13, %c0_14], %20 {strides = array<i32>} : memref<1x358xf32, #tpu.memory_space<vmem>>, vector<1x358xf32>,
    %cst_15 = arith.constant 0.000000e+00 : f32
    %22 = vector.broadcast %cst_15 : f32 to vector<1x358xf32>
    %c0_16 = arith.constant 0 : index
    %c0_17 = arith.constant 0 : index
    %23 = vector.load %arg8[%c0_16, %c0_17] : memref<1x358xf32, #tpu.memory_space<vmem>>, vector<1x358xf32>
    tpu.vector_store %arg8[%c0_16, %c0_17], %22 {strides = array<i32>} : memref<1x358xf32, #tpu.memory_space<vmem>>, vector<1x358xf32>,
    %c0_18 = arith.constant 0 : index
    %c51 = arith.constant 51 : index
    %24 = vector.load %arg7[%c0_18, %c51] : memref<1x358xf32, #tpu.memory_space<vmem>>, vector<1x256xf32>
    tpu.vector_store %arg7[%c0_18, %c51], %18 {strides = array<i32>} : memref<1x358xf32, #tpu.memory_space<vmem>>, vector<1x256xf32>,
    %c0_19 = arith.constant 0 : index
    %c51_20 = arith.constant 51 : index
    %25 = vector.load %arg8[%c0_19, %c51_20] : memref<1x358xf32, #tpu.memory_space<vmem>>, vector<1x256xf32>
    tpu.vector_store %arg8[%c0_19, %c51_20], %19 {strides = array<i32>} : memref<1x358xf32, #tpu.memory_space<vmem>>, vector<1x256xf32>,
    %c0_21 = arith.constant 0 : index
    %c0_22 = arith.constant 0 : index
    %26 = memref.load %arg5[%c0_21, %c0_22] : memref<2x49xf32, #tpu.memory_space<smem>>
    %c0_23 = arith.constant 0 : index
    %c1 = arith.constant 1 : index
    %27 = memref.load %arg5[%c0_23, %c1] : memref<2x49xf32, #tpu.memory_space<smem>>
    %c0_24 = arith.constant 0 : index
    %c2 = arith.constant 2 : index
    %28 = memref.load %arg5[%c0_24, %c2] : memref<2x49xf32, #tpu.memory_space<smem>>
    %c0_25 = arith.constant 0 : index
    %c3 = arith.constant 3 : index
    %29 = memref.load %arg5[%c0_25, %c3] : memref<2x49xf32, #tpu.memory_space<smem>>
    %c0_26 = arith.constant 0 : index
    %c4 = arith.constant 4 : index
    %30 = memref.load %arg5[%c0_26, %c4] : memref<2x49xf32, #tpu.memory_space<smem>>
    %c0_27 = arith.constant 0 : index
    %c5 = arith.constant 5 : index
    %31 = memref.load %arg5[%c0_27, %c5] : memref<2x49xf32, #tpu.memory_space<smem>>
    %c0_28 = arith.constant 0 : index
    %c6 = arith.constant 6 : index
    %32 = memref.load %arg5[%c0_28, %c6] : memref<2x49xf32, #tpu.memory_space<smem>>
    %c0_29 = arith.constant 0 : index
    %c7 = arith.constant 7 : index
    %33 = memref.load %arg5[%c0_29, %c7] : memref<2x49xf32, #tpu.memory_space<smem>>
    %c0_30 = arith.constant 0 : index
    %c8 = arith.constant 8 : index
    %34 = memref.load %arg5[%c0_30, %c8] : memref<2x49xf32, #tpu.memory_space<smem>>
    %c0_31 = arith.constant 0 : index
    %c9 = arith.constant 9 : index
    %35 = memref.load %arg5[%c0_31, %c9] : memref<2x49xf32, #tpu.memory_space<smem>>
    %c0_32 = arith.constant 0 : index
    %c10 = arith.constant 10 : index
    %36 = memref.load %arg5[%c0_32, %c10] : memref<2x49xf32, #tpu.memory_space<smem>>
    %c0_33 = arith.constant 0 : index
    %c11 = arith.constant 11 : index
    %37 = memref.load %arg5[%c0_33, %c11] : memref<2x49xf32, #tpu.memory_space<smem>>
    %c0_34 = arith.constant 0 : index
    %c12 = arith.constant 12 : index
    %38 = memref.load %arg5[%c0_34, %c12] : memref<2x49xf32, #tpu.memory_space<smem>>
    %c0_35 = arith.constant 0 : index
    %c13 = arith.constant 13 : index
    %39 = memref.load %arg5[%c0_35, %c13] : memref<2x49xf32, #tpu.memory_space<smem>>
    %c0_36 = arith.constant 0 : index
    %c14 = arith.constant 14 : index
    %40 = memref.load %arg5[%c0_36, %c14] : memref<2x49xf32, #tpu.memory_space<smem>>
    %c0_37 = arith.constant 0 : index
    %c15 = arith.constant 15 : index
    %41 = memref.load %arg5[%c0_37, %c15] : memref<2x49xf32, #tpu.memory_space<smem>>
    %c0_38 = arith.constant 0 : index
    %c16 = arith.constant 16 : index
    %42 = memref.load %arg5[%c0_38, %c16] : memref<2x49xf32, #tpu.memory_space<smem>>
    %c0_39 = arith.constant 0 : index
    %c17 = arith.constant 17 : index
    %43 = memref.load %arg5[%c0_39, %c17] : memref<2x49xf32, #tpu.memory_space<smem>>
    %c0_40 = arith.constant 0 : index
    %c18 = arith.constant 18 : index
    %44 = memref.load %arg5[%c0_40, %c18] : memref<2x49xf32, #tpu.memory_space<smem>>
    %c0_41 = arith.constant 0 : index
    %c19 = arith.constant 19 : index
    %45 = memref.load %arg5[%c0_41, %c19] : memref<2x49xf32, #tpu.memory_space<smem>>
    %c0_42 = arith.constant 0 : index
    %c20 = arith.constant 20 : index
    %46 = memref.load %arg5[%c0_42, %c20] : memref<2x49xf32, #tpu.memory_space<smem>>
    %c0_43 = arith.constant 0 : index
    %c21 = arith.constant 21 : index
    %47 = memref.load %arg5[%c0_43, %c21] : memref<2x49xf32, #tpu.memory_space<smem>>
    %c0_44 = arith.constant 0 : index
    %c22 = arith.constant 22 : index
    %48 = memref.load %arg5[%c0_44, %c22] : memref<2x49xf32, #tpu.memory_space<smem>>
    %c0_45 = arith.constant 0 : index
    %c23 = arith.constant 23 : index
    %49 = memref.load %arg5[%c0_45, %c23] : memref<2x49xf32, #tpu.memory_space<smem>>
    %c0_46 = arith.constant 0 : index
    %c24 = arith.constant 24 : index
    %50 = memref.load %arg5[%c0_46, %c24] : memref<2x49xf32, #tpu.memory_space<smem>>
    %c0_47 = arith.constant 0 : index
    %c25 = arith.constant 25 : index
    %51 = memref.load %arg5[%c0_47, %c25] : memref<2x49xf32, #tpu.memory_space<smem>>
    %c0_48 = arith.constant 0 : index
    %c26 = arith.constant 26 : index
    %52 = memref.load %arg5[%c0_48, %c26] : memref<2x49xf32, #tpu.memory_space<smem>>
    %c0_49 = arith.constant 0 : index
    %c27 = arith.constant 27 : index
    %53 = memref.load %arg5[%c0_49, %c27] : memref<2x49xf32, #tpu.memory_space<smem>>
    %c0_50 = arith.constant 0 : index
    %c28 = arith.constant 28 : index
    %54 = memref.load %arg5[%c0_50, %c28] : memref<2x49xf32, #tpu.memory_space<smem>>
    %c0_51 = arith.constant 0 : index
    %c29 = arith.constant 29 : index
    %55 = memref.load %arg5[%c0_51, %c29] : memref<2x49xf32, #tpu.memory_space<smem>>
    %c0_52 = arith.constant 0 : index
    %c30 = arith.constant 30 : index
    %56 = memref.load %arg5[%c0_52, %c30] : memref<2x49xf32, #tpu.memory_space<smem>>
    %c0_53 = arith.constant 0 : index
    %c31 = arith.constant 31 : index
    %57 = memref.load %arg5[%c0_53, %c31] : memref<2x49xf32, #tpu.memory_space<smem>>
    %c0_54 = arith.constant 0 : index
    %c32 = arith.constant 32 : index
    %58 = memref.load %arg5[%c0_54, %c32] : memref<2x49xf32, #tpu.memory_space<smem>>
    %c0_55 = arith.constant 0 : index
    %c33 = arith.constant 33 : index
    %59 = memref.load %arg5[%c0_55, %c33] : memref<2x49xf32, #tpu.memory_space<smem>>
    %c0_56 = arith.constant 0 : index
    %c34 = arith.constant 34 : index
    %60 = memref.load %arg5[%c0_56, %c34] : memref<2x49xf32, #tpu.memory_space<smem>>
    %c0_57 = arith.constant 0 : index
    %c35 = arith.constant 35 : index
    %61 = memref.load %arg5[%c0_57, %c35] : memref<2x49xf32, #tpu.memory_space<smem>>
    %c0_58 = arith.constant 0 : index
    %c36 = arith.constant 36 : index
    %62 = memref.load %arg5[%c0_58, %c36] : memref<2x49xf32, #tpu.memory_space<smem>>
    %c0_59 = arith.constant 0 : index
    %c37 = arith.constant 37 : index
    %63 = memref.load %arg5[%c0_59, %c37] : memref<2x49xf32, #tpu.memory_space<smem>>
    %c0_60 = arith.constant 0 : index
    %c38 = arith.constant 38 : index
    %64 = memref.load %arg5[%c0_60, %c38] : memref<2x49xf32, #tpu.memory_space<smem>>
    %c0_61 = arith.constant 0 : index
    %c39 = arith.constant 39 : index
    %65 = memref.load %arg5[%c0_61, %c39] : memref<2x49xf32, #tpu.memory_space<smem>>
    %c0_62 = arith.constant 0 : index
    %c40 = arith.constant 40 : index
    %66 = memref.load %arg5[%c0_62, %c40] : memref<2x49xf32, #tpu.memory_space<smem>>
    %c0_63 = arith.constant 0 : index
    %c41 = arith.constant 41 : index
    %67 = memref.load %arg5[%c0_63, %c41] : memref<2x49xf32, #tpu.memory_space<smem>>
    %c0_64 = arith.constant 0 : index
    %c42 = arith.constant 42 : index
    %68 = memref.load %arg5[%c0_64, %c42] : memref<2x49xf32, #tpu.memory_space<smem>>
    %c0_65 = arith.constant 0 : index
    %c43 = arith.constant 43 : index
    %69 = memref.load %arg5[%c0_65, %c43] : memref<2x49xf32, #tpu.memory_space<smem>>
    %c0_66 = arith.constant 0 : index
    %c44 = arith.constant 44 : index
    %70 = memref.load %arg5[%c0_66, %c44] : memref<2x49xf32, #tpu.memory_space<smem>>
    %c0_67 = arith.constant 0 : index
    %c45 = arith.constant 45 : index
    %71 = memref.load %arg5[%c0_67, %c45] : memref<2x49xf32, #tpu.memory_space<smem>>
    %c0_68 = arith.constant 0 : index
    %c46 = arith.constant 46 : index
    %72 = memref.load %arg5[%c0_68, %c46] : memref<2x49xf32, #tpu.memory_space<smem>>
    %c0_69 = arith.constant 0 : index
    %c47 = arith.constant 47 : index
    %73 = memref.load %arg5[%c0_69, %c47] : memref<2x49xf32, #tpu.memory_space<smem>>
    %c0_70 = arith.constant 0 : index
    %c48 = arith.constant 48 : index
    %74 = memref.load %arg5[%c0_70, %c48] : memref<2x49xf32, #tpu.memory_space<smem>>
    %c1_71 = arith.constant 1 : index
    %c0_72 = arith.constant 0 : index
    %75 = memref.load %arg5[%c1_71, %c0_72] : memref<2x49xf32, #tpu.memory_space<smem>>
    %c1_73 = arith.constant 1 : index
    %c1_74 = arith.constant 1 : index
    %76 = memref.load %arg5[%c1_73, %c1_74] : memref<2x49xf32, #tpu.memory_space<smem>>
    %c1_75 = arith.constant 1 : index
    %c2_76 = arith.constant 2 : index
    %77 = memref.load %arg5[%c1_75, %c2_76] : memref<2x49xf32, #tpu.memory_space<smem>>
    %c1_77 = arith.constant 1 : index
    %c3_78 = arith.constant 3 : index
    %78 = memref.load %arg5[%c1_77, %c3_78] : memref<2x49xf32, #tpu.memory_space<smem>>
    %c1_79 = arith.constant 1 : index
    %c4_80 = arith.constant 4 : index
    %79 = memref.load %arg5[%c1_79, %c4_80] : memref<2x49xf32, #tpu.memory_space<smem>>
    %c1_81 = arith.constant 1 : index
    %c5_82 = arith.constant 5 : index
    %80 = memref.load %arg5[%c1_81, %c5_82] : memref<2x49xf32, #tpu.memory_space<smem>>
    %c1_83 = arith.constant 1 : index
    %c6_84 = arith.constant 6 : index
    %81 = memref.load %arg5[%c1_83, %c6_84] : memref<2x49xf32, #tpu.memory_space<smem>>
    %c1_85 = arith.constant 1 : index
    %c7_86 = arith.constant 7 : index
    %82 = memref.load %arg5[%c1_85, %c7_86] : memref<2x49xf32, #tpu.memory_space<smem>>
    %c1_87 = arith.constant 1 : index
    %c8_88 = arith.constant 8 : index
    %83 = memref.load %arg5[%c1_87, %c8_88] : memref<2x49xf32, #tpu.memory_space<smem>>
    %c1_89 = arith.constant 1 : index
    %c9_90 = arith.constant 9 : index
    %84 = memref.load %arg5[%c1_89, %c9_90] : memref<2x49xf32, #tpu.memory_space<smem>>
    %c1_91 = arith.constant 1 : index
    %c10_92 = arith.constant 10 : index
    %85 = memref.load %arg5[%c1_91, %c10_92] : memref<2x49xf32, #tpu.memory_space<smem>>
    %c1_93 = arith.constant 1 : index
    %c11_94 = arith.constant 11 : index
    %86 = memref.load %arg5[%c1_93, %c11_94] : memref<2x49xf32, #tpu.memory_space<smem>>
    %c1_95 = arith.constant 1 : index
    %c12_96 = arith.constant 12 : index
    %87 = memref.load %arg5[%c1_95, %c12_96] : memref<2x49xf32, #tpu.memory_space<smem>>
    %c1_97 = arith.constant 1 : index
    %c13_98 = arith.constant 13 : index
    %88 = memref.load %arg5[%c1_97, %c13_98] : memref<2x49xf32, #tpu.memory_space<smem>>
    %c1_99 = arith.constant 1 : index
    %c14_100 = arith.constant 14 : index
    %89 = memref.load %arg5[%c1_99, %c14_100] : memref<2x49xf32, #tpu.memory_space<smem>>
    %c1_101 = arith.constant 1 : index
    %c15_102 = arith.constant 15 : index
    %90 = memref.load %arg5[%c1_101, %c15_102] : memref<2x49xf32, #tpu.memory_space<smem>>
    %c1_103 = arith.constant 1 : index
    %c16_104 = arith.constant 16 : index
    %91 = memref.load %arg5[%c1_103, %c16_104] : memref<2x49xf32, #tpu.memory_space<smem>>
    %c1_105 = arith.constant 1 : index
    %c17_106 = arith.constant 17 : index
    %92 = memref.load %arg5[%c1_105, %c17_106] : memref<2x49xf32, #tpu.memory_space<smem>>
    %c1_107 = arith.constant 1 : index
    %c18_108 = arith.constant 18 : index
    %93 = memref.load %arg5[%c1_107, %c18_108] : memref<2x49xf32, #tpu.memory_space<smem>>
    %c1_109 = arith.constant 1 : index
    %c19_110 = arith.constant 19 : index
    %94 = memref.load %arg5[%c1_109, %c19_110] : memref<2x49xf32, #tpu.memory_space<smem>>
    %c1_111 = arith.constant 1 : index
    %c20_112 = arith.constant 20 : index
    %95 = memref.load %arg5[%c1_111, %c20_112] : memref<2x49xf32, #tpu.memory_space<smem>>
    %c1_113 = arith.constant 1 : index
    %c21_114 = arith.constant 21 : index
    %96 = memref.load %arg5[%c1_113, %c21_114] : memref<2x49xf32, #tpu.memory_space<smem>>
    %c1_115 = arith.constant 1 : index
    %c22_116 = arith.constant 22 : index
    %97 = memref.load %arg5[%c1_115, %c22_116] : memref<2x49xf32, #tpu.memory_space<smem>>
    %c1_117 = arith.constant 1 : index
    %c23_118 = arith.constant 23 : index
    %98 = memref.load %arg5[%c1_117, %c23_118] : memref<2x49xf32, #tpu.memory_space<smem>>
    %c1_119 = arith.constant 1 : index
    %c24_120 = arith.constant 24 : index
    %99 = memref.load %arg5[%c1_119, %c24_120] : memref<2x49xf32, #tpu.memory_space<smem>>
    %c1_121 = arith.constant 1 : index
    %c25_122 = arith.constant 25 : index
    %100 = memref.load %arg5[%c1_121, %c25_122] : memref<2x49xf32, #tpu.memory_space<smem>>
    %c1_123 = arith.constant 1 : index
    %c26_124 = arith.constant 26 : index
    %101 = memref.load %arg5[%c1_123, %c26_124] : memref<2x49xf32, #tpu.memory_space<smem>>
    %c1_125 = arith.constant 1 : index
    %c27_126 = arith.constant 27 : index
    %102 = memref.load %arg5[%c1_125, %c27_126] : memref<2x49xf32, #tpu.memory_space<smem>>
    %c1_127 = arith.constant 1 : index
    %c28_128 = arith.constant 28 : index
    %103 = memref.load %arg5[%c1_127, %c28_128] : memref<2x49xf32, #tpu.memory_space<smem>>
    %c1_129 = arith.constant 1 : index
    %c29_130 = arith.constant 29 : index
    %104 = memref.load %arg5[%c1_129, %c29_130] : memref<2x49xf32, #tpu.memory_space<smem>>
    %c1_131 = arith.constant 1 : index
    %c30_132 = arith.constant 30 : index
    %105 = memref.load %arg5[%c1_131, %c30_132] : memref<2x49xf32, #tpu.memory_space<smem>>
    %c1_133 = arith.constant 1 : index
    %c31_134 = arith.constant 31 : index
    %106 = memref.load %arg5[%c1_133, %c31_134] : memref<2x49xf32, #tpu.memory_space<smem>>
    %c1_135 = arith.constant 1 : index
    %c32_136 = arith.constant 32 : index
    %107 = memref.load %arg5[%c1_135, %c32_136] : memref<2x49xf32, #tpu.memory_space<smem>>
    %c1_137 = arith.constant 1 : index
    %c33_138 = arith.constant 33 : index
    %108 = memref.load %arg5[%c1_137, %c33_138] : memref<2x49xf32, #tpu.memory_space<smem>>
    %c1_139 = arith.constant 1 : index
    %c34_140 = arith.constant 34 : index
    %109 = memref.load %arg5[%c1_139, %c34_140] : memref<2x49xf32, #tpu.memory_space<smem>>
    %c1_141 = arith.constant 1 : index
    %c35_142 = arith.constant 35 : index
    %110 = memref.load %arg5[%c1_141, %c35_142] : memref<2x49xf32, #tpu.memory_space<smem>>
    %c1_143 = arith.constant 1 : index
    %c36_144 = arith.constant 36 : index
    %111 = memref.load %arg5[%c1_143, %c36_144] : memref<2x49xf32, #tpu.memory_space<smem>>
    %c1_145 = arith.constant 1 : index
    %c37_146 = arith.constant 37 : index
    %112 = memref.load %arg5[%c1_145, %c37_146] : memref<2x49xf32, #tpu.memory_space<smem>>
    %c1_147 = arith.constant 1 : index
    %c38_148 = arith.constant 38 : index
    %113 = memref.load %arg5[%c1_147, %c38_148] : memref<2x49xf32, #tpu.memory_space<smem>>
    %c1_149 = arith.constant 1 : index
    %c39_150 = arith.constant 39 : index
    %114 = memref.load %arg5[%c1_149, %c39_150] : memref<2x49xf32, #tpu.memory_space<smem>>
    %c1_151 = arith.constant 1 : index
    %c40_152 = arith.constant 40 : index
    %115 = memref.load %arg5[%c1_151, %c40_152] : memref<2x49xf32, #tpu.memory_space<smem>>
    %c1_153 = arith.constant 1 : index
    %c41_154 = arith.constant 41 : index
    %116 = memref.load %arg5[%c1_153, %c41_154] : memref<2x49xf32, #tpu.memory_space<smem>>
    %c1_155 = arith.constant 1 : index
    %c42_156 = arith.constant 42 : index
    %117 = memref.load %arg5[%c1_155, %c42_156] : memref<2x49xf32, #tpu.memory_space<smem>>
    %c1_157 = arith.constant 1 : index
    %c43_158 = arith.constant 43 : index
    %118 = memref.load %arg5[%c1_157, %c43_158] : memref<2x49xf32, #tpu.memory_space<smem>>
    %c1_159 = arith.constant 1 : index
    %c44_160 = arith.constant 44 : index
    %119 = memref.load %arg5[%c1_159, %c44_160] : memref<2x49xf32, #tpu.memory_space<smem>>
    %c1_161 = arith.constant 1 : index
    %c45_162 = arith.constant 45 : index
    %120 = memref.load %arg5[%c1_161, %c45_162] : memref<2x49xf32, #tpu.memory_space<smem>>
    %c1_163 = arith.constant 1 : index
    %c46_164 = arith.constant 46 : index
    %121 = memref.load %arg5[%c1_163, %c46_164] : memref<2x49xf32, #tpu.memory_space<smem>>
    %c1_165 = arith.constant 1 : index
    %c47_166 = arith.constant 47 : index
    %122 = memref.load %arg5[%c1_165, %c47_166] : memref<2x49xf32, #tpu.memory_space<smem>>
    %c1_167 = arith.constant 1 : index
    %c48_168 = arith.constant 48 : index
    %123 = memref.load %arg5[%c1_167, %c48_168] : memref<2x49xf32, #tpu.memory_space<smem>>
    %cst_169 = arith.constant 0.000000e+00 : f32
    %124 = vector.broadcast %cst_169 : f32 to vector<1x256xf32>
    %cst_170 = arith.constant 0.000000e+00 : f32
    %125 = vector.broadcast %cst_170 : f32 to vector<1x256xf32>
    %cst_171 = arith.constant 0.000000e+00 : f32
    %126 = vector.broadcast %cst_171 : f32 to vector<1x256xf32>
    %cst_172 = arith.constant 0.000000e+00 : f32
    %127 = vector.broadcast %cst_172 : f32 to vector<1x256xf32>
    %c0_173 = arith.constant 0 : index
    %c0_174 = arith.constant 0 : index
    %128 = vector.load %arg7[%c0_173, %c0_174] : memref<1x358xf32, #tpu.memory_space<vmem>>, vector<1x256xf32>
    %129 = vector.broadcast %26 : f32 to vector<1x256xf32>
    %130 = arith.mulf %129, %128 : vector<1x256xf32>
    %131 = arith.addf %126, %130 : vector<1x256xf32>
    %c0_175 = arith.constant 0 : index
    %c0_176 = arith.constant 0 : index
    %132 = vector.load %arg8[%c0_175, %c0_176] : memref<1x358xf32, #tpu.memory_space<vmem>>, vector<1x256xf32>
    %133 = vector.broadcast %75 : f32 to vector<1x256xf32>
    %134 = arith.mulf %133, %132 : vector<1x256xf32>
    %135 = arith.addf %127, %134 : vector<1x256xf32>
    %c0_177 = arith.constant 0 : index
    %c16_178 = arith.constant 16 : index
    %136 = vector.load %arg7[%c0_177, %c16_178] : memref<1x358xf32, #tpu.memory_space<vmem>>, vector<1x256xf32>
    %137 = vector.broadcast %33 : f32 to vector<1x256xf32>
    %138 = arith.mulf %137, %136 : vector<1x256xf32>
    %139 = arith.addf %131, %138 : vector<1x256xf32>
    %c0_179 = arith.constant 0 : index
    %c16_180 = arith.constant 16 : index
    %140 = vector.load %arg8[%c0_179, %c16_180] : memref<1x358xf32, #tpu.memory_space<vmem>>, vector<1x256xf32>
    %141 = vector.broadcast %82 : f32 to vector<1x256xf32>
    %142 = arith.mulf %141, %140 : vector<1x256xf32>
    %143 = arith.addf %135, %142 : vector<1x256xf32>
    %c0_181 = arith.constant 0 : index
    %c32_182 = arith.constant 32 : index
    %144 = vector.load %arg7[%c0_181, %c32_182] : memref<1x358xf32, #tpu.memory_space<vmem>>, vector<1x256xf32>
    %145 = vector.broadcast %40 : f32 to vector<1x256xf32>
    %146 = arith.mulf %145, %144 : vector<1x256xf32>
    %147 = arith.addf %139, %146 : vector<1x256xf32>
    %c0_183 = arith.constant 0 : index
    %c32_184 = arith.constant 32 : index
    %148 = vector.load %arg8[%c0_183, %c32_184] : memref<1x358xf32, #tpu.memory_space<vmem>>, vector<1x256xf32>
    %149 = vector.broadcast %89 : f32 to vector<1x256xf32>
    %150 = arith.mulf %149, %148 : vector<1x256xf32>
    %151 = arith.addf %143, %150 : vector<1x256xf32>
    %c0_185 = arith.constant 0 : index
    %c48_186 = arith.constant 48 : index
    %152 = vector.load %arg7[%c0_185, %c48_186] : memref<1x358xf32, #tpu.memory_space<vmem>>, vector<1x256xf32>
    %153 = vector.broadcast %47 : f32 to vector<1x256xf32>
    %154 = arith.mulf %153, %152 : vector<1x256xf32>
    %155 = arith.addf %147, %154 : vector<1x256xf32>
    %c0_187 = arith.constant 0 : index
    %c48_188 = arith.constant 48 : index
    %156 = vector.load %arg8[%c0_187, %c48_188] : memref<1x358xf32, #tpu.memory_space<vmem>>, vector<1x256xf32>
    %157 = vector.broadcast %96 : f32 to vector<1x256xf32>
    %158 = arith.mulf %157, %156 : vector<1x256xf32>
    %159 = arith.addf %151, %158 : vector<1x256xf32>
    %c0_189 = arith.constant 0 : index
    %c64 = arith.constant 64 : index
    %160 = vector.load %arg7[%c0_189, %c64] : memref<1x358xf32, #tpu.memory_space<vmem>>, vector<1x256xf32>
    %161 = vector.broadcast %54 : f32 to vector<1x256xf32>
    %162 = arith.mulf %161, %160 : vector<1x256xf32>
    %163 = arith.addf %155, %162 : vector<1x256xf32>
    %c0_190 = arith.constant 0 : index
    %c64_191 = arith.constant 64 : index
    %164 = vector.load %arg8[%c0_190, %c64_191] : memref<1x358xf32, #tpu.memory_space<vmem>>, vector<1x256xf32>
    %165 = vector.broadcast %103 : f32 to vector<1x256xf32>
    %166 = arith.mulf %165, %164 : vector<1x256xf32>
    %167 = arith.addf %159, %166 : vector<1x256xf32>
    %c0_192 = arith.constant 0 : index
    %c80 = arith.constant 80 : index
    %168 = vector.load %arg7[%c0_192, %c80] : memref<1x358xf32, #tpu.memory_space<vmem>>, vector<1x256xf32>
    %169 = vector.broadcast %61 : f32 to vector<1x256xf32>
    %170 = arith.mulf %169, %168 : vector<1x256xf32>
    %171 = arith.addf %163, %170 : vector<1x256xf32>
    %c0_193 = arith.constant 0 : index
    %c80_194 = arith.constant 80 : index
    %172 = vector.load %arg8[%c0_193, %c80_194] : memref<1x358xf32, #tpu.memory_space<vmem>>, vector<1x256xf32>
    %173 = vector.broadcast %110 : f32 to vector<1x256xf32>
    %174 = arith.mulf %173, %172 : vector<1x256xf32>
    %175 = arith.addf %167, %174 : vector<1x256xf32>
    %c0_195 = arith.constant 0 : index
    %c96 = arith.constant 96 : index
    %176 = vector.load %arg7[%c0_195, %c96] : memref<1x358xf32, #tpu.memory_space<vmem>>, vector<1x256xf32>
    %177 = vector.broadcast %68 : f32 to vector<1x256xf32>
    %178 = arith.mulf %177, %176 : vector<1x256xf32>
    %179 = arith.addf %171, %178 : vector<1x256xf32>
    %c0_196 = arith.constant 0 : index
    %c96_197 = arith.constant 96 : index
    %180 = vector.load %arg8[%c0_196, %c96_197] : memref<1x358xf32, #tpu.memory_space<vmem>>, vector<1x256xf32>
    %181 = vector.broadcast %117 : f32 to vector<1x256xf32>
    %182 = arith.mulf %181, %180 : vector<1x256xf32>
    %183 = arith.addf %175, %182 : vector<1x256xf32>
    %184 = arith.addf %179, %183 : vector<1x256xf32>
    %c0_198 = arith.constant 0 : index
    %c0_199 = arith.constant 0 : index
    %185 = vector.load %arg4[%c0_198, %c0_199] : memref<7x256xf32, #tpu.memory_space<vmem>>, vector<1x256xf32>
    %186 = arith.mulf %184, %185 : vector<1x256xf32>
    %187 = arith.addf %124, %186 : vector<1x256xf32>
    %cst_200 = arith.constant 0.000000e+00 : f32
    %188 = vector.broadcast %cst_200 : f32 to vector<1x256xf32>
    %cst_201 = arith.constant 0.000000e+00 : f32
    %189 = vector.broadcast %cst_201 : f32 to vector<1x256xf32>
    %c0_202 = arith.constant 0 : index
    %c1_203 = arith.constant 1 : index
    %190 = vector.load %arg7[%c0_202, %c1_203] : memref<1x358xf32, #tpu.memory_space<vmem>>, vector<1x256xf32>
    %191 = vector.broadcast %27 : f32 to vector<1x256xf32>
    %192 = arith.mulf %191, %190 : vector<1x256xf32>
    %193 = arith.addf %188, %192 : vector<1x256xf32>
    %c0_204 = arith.constant 0 : index
    %c1_205 = arith.constant 1 : index
    %194 = vector.load %arg8[%c0_204, %c1_205] : memref<1x358xf32, #tpu.memory_space<vmem>>, vector<1x256xf32>
    %195 = vector.broadcast %76 : f32 to vector<1x256xf32>
    %196 = arith.mulf %195, %194 : vector<1x256xf32>
    %197 = arith.addf %189, %196 : vector<1x256xf32>
    %c0_206 = arith.constant 0 : index
    %c17_207 = arith.constant 17 : index
    %198 = vector.load %arg7[%c0_206, %c17_207] : memref<1x358xf32, #tpu.memory_space<vmem>>, vector<1x256xf32>
    %199 = vector.broadcast %34 : f32 to vector<1x256xf32>
    %200 = arith.mulf %199, %198 : vector<1x256xf32>
    %201 = arith.addf %193, %200 : vector<1x256xf32>
    %c0_208 = arith.constant 0 : index
    %c17_209 = arith.constant 17 : index
    %202 = vector.load %arg8[%c0_208, %c17_209] : memref<1x358xf32, #tpu.memory_space<vmem>>, vector<1x256xf32>
    %203 = vector.broadcast %83 : f32 to vector<1x256xf32>
    %204 = arith.mulf %203, %202 : vector<1x256xf32>
    %205 = arith.addf %197, %204 : vector<1x256xf32>
    %c0_210 = arith.constant 0 : index
    %c33_211 = arith.constant 33 : index
    %206 = vector.load %arg7[%c0_210, %c33_211] : memref<1x358xf32, #tpu.memory_space<vmem>>, vector<1x256xf32>
    %207 = vector.broadcast %41 : f32 to vector<1x256xf32>
    %208 = arith.mulf %207, %206 : vector<1x256xf32>
    %209 = arith.addf %201, %208 : vector<1x256xf32>
    %c0_212 = arith.constant 0 : index
    %c33_213 = arith.constant 33 : index
    %210 = vector.load %arg8[%c0_212, %c33_213] : memref<1x358xf32, #tpu.memory_space<vmem>>, vector<1x256xf32>
    %211 = vector.broadcast %90 : f32 to vector<1x256xf32>
    %212 = arith.mulf %211, %210 : vector<1x256xf32>
    %213 = arith.addf %205, %212 : vector<1x256xf32>
    %c0_214 = arith.constant 0 : index
    %c49 = arith.constant 49 : index
    %214 = vector.load %arg7[%c0_214, %c49] : memref<1x358xf32, #tpu.memory_space<vmem>>, vector<1x256xf32>
    %215 = vector.broadcast %48 : f32 to vector<1x256xf32>
    %216 = arith.mulf %215, %214 : vector<1x256xf32>
    %217 = arith.addf %209, %216 : vector<1x256xf32>
    %c0_215 = arith.constant 0 : index
    %c49_216 = arith.constant 49 : index
    %218 = vector.load %arg8[%c0_215, %c49_216] : memref<1x358xf32, #tpu.memory_space<vmem>>, vector<1x256xf32>
    %219 = vector.broadcast %97 : f32 to vector<1x256xf32>
    %220 = arith.mulf %219, %218 : vector<1x256xf32>
    %221 = arith.addf %213, %220 : vector<1x256xf32>
    %c0_217 = arith.constant 0 : index
    %c65 = arith.constant 65 : index
    %222 = vector.load %arg7[%c0_217, %c65] : memref<1x358xf32, #tpu.memory_space<vmem>>, vector<1x256xf32>
    %223 = vector.broadcast %55 : f32 to vector<1x256xf32>
    %224 = arith.mulf %223, %222 : vector<1x256xf32>
    %225 = arith.addf %217, %224 : vector<1x256xf32>
    %c0_218 = arith.constant 0 : index
    %c65_219 = arith.constant 65 : index
    %226 = vector.load %arg8[%c0_218, %c65_219] : memref<1x358xf32, #tpu.memory_space<vmem>>, vector<1x256xf32>
    %227 = vector.broadcast %104 : f32 to vector<1x256xf32>
    %228 = arith.mulf %227, %226 : vector<1x256xf32>
    %229 = arith.addf %221, %228 : vector<1x256xf32>
    %c0_220 = arith.constant 0 : index
    %c81 = arith.constant 81 : index
    %230 = vector.load %arg7[%c0_220, %c81] : memref<1x358xf32, #tpu.memory_space<vmem>>, vector<1x256xf32>
    %231 = vector.broadcast %62 : f32 to vector<1x256xf32>
    %232 = arith.mulf %231, %230 : vector<1x256xf32>
    %233 = arith.addf %225, %232 : vector<1x256xf32>
    %c0_221 = arith.constant 0 : index
    %c81_222 = arith.constant 81 : index
    %234 = vector.load %arg8[%c0_221, %c81_222] : memref<1x358xf32, #tpu.memory_space<vmem>>, vector<1x256xf32>
    %235 = vector.broadcast %111 : f32 to vector<1x256xf32>
    %236 = arith.mulf %235, %234 : vector<1x256xf32>
    %237 = arith.addf %229, %236 : vector<1x256xf32>
    %c0_223 = arith.constant 0 : index
    %c97 = arith.constant 97 : index
    %238 = vector.load %arg7[%c0_223, %c97] : memref<1x358xf32, #tpu.memory_space<vmem>>, vector<1x256xf32>
    %239 = vector.broadcast %69 : f32 to vector<1x256xf32>
    %240 = arith.mulf %239, %238 : vector<1x256xf32>
    %241 = arith.addf %233, %240 : vector<1x256xf32>
    %c0_224 = arith.constant 0 : index
    %c97_225 = arith.constant 97 : index
    %242 = vector.load %arg8[%c0_224, %c97_225] : memref<1x358xf32, #tpu.memory_space<vmem>>, vector<1x256xf32>
    %243 = vector.broadcast %118 : f32 to vector<1x256xf32>
    %244 = arith.mulf %243, %242 : vector<1x256xf32>
    %245 = arith.addf %237, %244 : vector<1x256xf32>
    %246 = arith.addf %241, %245 : vector<1x256xf32>
    %c1_226 = arith.constant 1 : index
    %c0_227 = arith.constant 0 : index
    %247 = vector.load %arg4[%c1_226, %c0_227] : memref<7x256xf32, #tpu.memory_space<vmem>>, vector<1x256xf32>
    %248 = arith.mulf %246, %247 : vector<1x256xf32>
    %249 = arith.addf %125, %248 : vector<1x256xf32>
    %cst_228 = arith.constant 0.000000e+00 : f32
    %250 = vector.broadcast %cst_228 : f32 to vector<1x256xf32>
    %cst_229 = arith.constant 0.000000e+00 : f32
    %251 = vector.broadcast %cst_229 : f32 to vector<1x256xf32>
    %c0_230 = arith.constant 0 : index
    %c2_231 = arith.constant 2 : index
    %252 = vector.load %arg7[%c0_230, %c2_231] : memref<1x358xf32, #tpu.memory_space<vmem>>, vector<1x256xf32>
    %253 = vector.broadcast %28 : f32 to vector<1x256xf32>
    %254 = arith.mulf %253, %252 : vector<1x256xf32>
    %255 = arith.addf %250, %254 : vector<1x256xf32>
    %c0_232 = arith.constant 0 : index
    %c2_233 = arith.constant 2 : index
    %256 = vector.load %arg8[%c0_232, %c2_233] : memref<1x358xf32, #tpu.memory_space<vmem>>, vector<1x256xf32>
    %257 = vector.broadcast %77 : f32 to vector<1x256xf32>
    %258 = arith.mulf %257, %256 : vector<1x256xf32>
    %259 = arith.addf %251, %258 : vector<1x256xf32>
    %c0_234 = arith.constant 0 : index
    %c18_235 = arith.constant 18 : index
    %260 = vector.load %arg7[%c0_234, %c18_235] : memref<1x358xf32, #tpu.memory_space<vmem>>, vector<1x256xf32>
    %261 = vector.broadcast %35 : f32 to vector<1x256xf32>
    %262 = arith.mulf %261, %260 : vector<1x256xf32>
    %263 = arith.addf %255, %262 : vector<1x256xf32>
    %c0_236 = arith.constant 0 : index
    %c18_237 = arith.constant 18 : index
    %264 = vector.load %arg8[%c0_236, %c18_237] : memref<1x358xf32, #tpu.memory_space<vmem>>, vector<1x256xf32>
    %265 = vector.broadcast %84 : f32 to vector<1x256xf32>
    %266 = arith.mulf %265, %264 : vector<1x256xf32>
    %267 = arith.addf %259, %266 : vector<1x256xf32>
    %c0_238 = arith.constant 0 : index
    %c34_239 = arith.constant 34 : index
    %268 = vector.load %arg7[%c0_238, %c34_239] : memref<1x358xf32, #tpu.memory_space<vmem>>, vector<1x256xf32>
    %269 = vector.broadcast %42 : f32 to vector<1x256xf32>
    %270 = arith.mulf %269, %268 : vector<1x256xf32>
    %271 = arith.addf %263, %270 : vector<1x256xf32>
    %c0_240 = arith.constant 0 : index
    %c34_241 = arith.constant 34 : index
    %272 = vector.load %arg8[%c0_240, %c34_241] : memref<1x358xf32, #tpu.memory_space<vmem>>, vector<1x256xf32>
    %273 = vector.broadcast %91 : f32 to vector<1x256xf32>
    %274 = arith.mulf %273, %272 : vector<1x256xf32>
    %275 = arith.addf %267, %274 : vector<1x256xf32>
    %c0_242 = arith.constant 0 : index
    %c50 = arith.constant 50 : index
    %276 = vector.load %arg7[%c0_242, %c50] : memref<1x358xf32, #tpu.memory_space<vmem>>, vector<1x256xf32>
    %277 = vector.broadcast %49 : f32 to vector<1x256xf32>
    %278 = arith.mulf %277, %276 : vector<1x256xf32>
    %279 = arith.addf %271, %278 : vector<1x256xf32>
    %c0_243 = arith.constant 0 : index
    %c50_244 = arith.constant 50 : index
    %280 = vector.load %arg8[%c0_243, %c50_244] : memref<1x358xf32, #tpu.memory_space<vmem>>, vector<1x256xf32>
    %281 = vector.broadcast %98 : f32 to vector<1x256xf32>
    %282 = arith.mulf %281, %280 : vector<1x256xf32>
    %283 = arith.addf %275, %282 : vector<1x256xf32>
    %c0_245 = arith.constant 0 : index
    %c66 = arith.constant 66 : index
    %284 = vector.load %arg7[%c0_245, %c66] : memref<1x358xf32, #tpu.memory_space<vmem>>, vector<1x256xf32>
    %285 = vector.broadcast %56 : f32 to vector<1x256xf32>
    %286 = arith.mulf %285, %284 : vector<1x256xf32>
    %287 = arith.addf %279, %286 : vector<1x256xf32>
    %c0_246 = arith.constant 0 : index
    %c66_247 = arith.constant 66 : index
    %288 = vector.load %arg8[%c0_246, %c66_247] : memref<1x358xf32, #tpu.memory_space<vmem>>, vector<1x256xf32>
    %289 = vector.broadcast %105 : f32 to vector<1x256xf32>
    %290 = arith.mulf %289, %288 : vector<1x256xf32>
    %291 = arith.addf %283, %290 : vector<1x256xf32>
    %c0_248 = arith.constant 0 : index
    %c82 = arith.constant 82 : index
    %292 = vector.load %arg7[%c0_248, %c82] : memref<1x358xf32, #tpu.memory_space<vmem>>, vector<1x256xf32>
    %293 = vector.broadcast %63 : f32 to vector<1x256xf32>
    %294 = arith.mulf %293, %292 : vector<1x256xf32>
    %295 = arith.addf %287, %294 : vector<1x256xf32>
    %c0_249 = arith.constant 0 : index
    %c82_250 = arith.constant 82 : index
    %296 = vector.load %arg8[%c0_249, %c82_250] : memref<1x358xf32, #tpu.memory_space<vmem>>, vector<1x256xf32>
    %297 = vector.broadcast %112 : f32 to vector<1x256xf32>
    %298 = arith.mulf %297, %296 : vector<1x256xf32>
    %299 = arith.addf %291, %298 : vector<1x256xf32>
    %c0_251 = arith.constant 0 : index
    %c98 = arith.constant 98 : index
    %300 = vector.load %arg7[%c0_251, %c98] : memref<1x358xf32, #tpu.memory_space<vmem>>, vector<1x256xf32>
    %301 = vector.broadcast %70 : f32 to vector<1x256xf32>
    %302 = arith.mulf %301, %300 : vector<1x256xf32>
    %303 = arith.addf %295, %302 : vector<1x256xf32>
    %c0_252 = arith.constant 0 : index
    %c98_253 = arith.constant 98 : index
    %304 = vector.load %arg8[%c0_252, %c98_253] : memref<1x358xf32, #tpu.memory_space<vmem>>, vector<1x256xf32>
    %305 = vector.broadcast %119 : f32 to vector<1x256xf32>
    %306 = arith.mulf %305, %304 : vector<1x256xf32>
    %307 = arith.addf %299, %306 : vector<1x256xf32>
    %308 = arith.addf %303, %307 : vector<1x256xf32>
    %c2_254 = arith.constant 2 : index
    %c0_255 = arith.constant 0 : index
    %309 = vector.load %arg4[%c2_254, %c0_255] : memref<7x256xf32, #tpu.memory_space<vmem>>, vector<1x256xf32>
    %310 = arith.mulf %308, %309 : vector<1x256xf32>
    %311 = arith.addf %187, %310 : vector<1x256xf32>
    %cst_256 = arith.constant 0.000000e+00 : f32
    %312 = vector.broadcast %cst_256 : f32 to vector<1x256xf32>
    %cst_257 = arith.constant 0.000000e+00 : f32
    %313 = vector.broadcast %cst_257 : f32 to vector<1x256xf32>
    %c0_258 = arith.constant 0 : index
    %c3_259 = arith.constant 3 : index
    %314 = vector.load %arg7[%c0_258, %c3_259] : memref<1x358xf32, #tpu.memory_space<vmem>>, vector<1x256xf32>
    %315 = vector.broadcast %29 : f32 to vector<1x256xf32>
    %316 = arith.mulf %315, %314 : vector<1x256xf32>
    %317 = arith.addf %312, %316 : vector<1x256xf32>
    %c0_260 = arith.constant 0 : index
    %c3_261 = arith.constant 3 : index
    %318 = vector.load %arg8[%c0_260, %c3_261] : memref<1x358xf32, #tpu.memory_space<vmem>>, vector<1x256xf32>
    %319 = vector.broadcast %78 : f32 to vector<1x256xf32>
    %320 = arith.mulf %319, %318 : vector<1x256xf32>
    %321 = arith.addf %313, %320 : vector<1x256xf32>
    %c0_262 = arith.constant 0 : index
    %c19_263 = arith.constant 19 : index
    %322 = vector.load %arg7[%c0_262, %c19_263] : memref<1x358xf32, #tpu.memory_space<vmem>>, vector<1x256xf32>
    %323 = vector.broadcast %36 : f32 to vector<1x256xf32>
    %324 = arith.mulf %323, %322 : vector<1x256xf32>
    %325 = arith.addf %317, %324 : vector<1x256xf32>
    %c0_264 = arith.constant 0 : index
    %c19_265 = arith.constant 19 : index
    %326 = vector.load %arg8[%c0_264, %c19_265] : memref<1x358xf32, #tpu.memory_space<vmem>>, vector<1x256xf32>
    %327 = vector.broadcast %85 : f32 to vector<1x256xf32>
    %328 = arith.mulf %327, %326 : vector<1x256xf32>
    %329 = arith.addf %321, %328 : vector<1x256xf32>
    %c0_266 = arith.constant 0 : index
    %c35_267 = arith.constant 35 : index
    %330 = vector.load %arg7[%c0_266, %c35_267] : memref<1x358xf32, #tpu.memory_space<vmem>>, vector<1x256xf32>
    %331 = vector.broadcast %43 : f32 to vector<1x256xf32>
    %332 = arith.mulf %331, %330 : vector<1x256xf32>
    %333 = arith.addf %325, %332 : vector<1x256xf32>
    %c0_268 = arith.constant 0 : index
    %c35_269 = arith.constant 35 : index
    %334 = vector.load %arg8[%c0_268, %c35_269] : memref<1x358xf32, #tpu.memory_space<vmem>>, vector<1x256xf32>
    %335 = vector.broadcast %92 : f32 to vector<1x256xf32>
    %336 = arith.mulf %335, %334 : vector<1x256xf32>
    %337 = arith.addf %329, %336 : vector<1x256xf32>
    %c0_270 = arith.constant 0 : index
    %c51_271 = arith.constant 51 : index
    %338 = vector.load %arg7[%c0_270, %c51_271] : memref<1x358xf32, #tpu.memory_space<vmem>>, vector<1x256xf32>
    %339 = vector.broadcast %50 : f32 to vector<1x256xf32>
    %340 = arith.mulf %339, %338 : vector<1x256xf32>
    %341 = arith.addf %333, %340 : vector<1x256xf32>
    %c0_272 = arith.constant 0 : index
    %c51_273 = arith.constant 51 : index
    %342 = vector.load %arg8[%c0_272, %c51_273] : memref<1x358xf32, #tpu.memory_space<vmem>>, vector<1x256xf32>
    %343 = vector.broadcast %99 : f32 to vector<1x256xf32>
    %344 = arith.mulf %343, %342 : vector<1x256xf32>
    %345 = arith.addf %337, %344 : vector<1x256xf32>
    %c0_274 = arith.constant 0 : index
    %c67 = arith.constant 67 : index
    %346 = vector.load %arg7[%c0_274, %c67] : memref<1x358xf32, #tpu.memory_space<vmem>>, vector<1x256xf32>
    %347 = vector.broadcast %57 : f32 to vector<1x256xf32>
    %348 = arith.mulf %347, %346 : vector<1x256xf32>
    %349 = arith.addf %341, %348 : vector<1x256xf32>
    %c0_275 = arith.constant 0 : index
    %c67_276 = arith.constant 67 : index
    %350 = vector.load %arg8[%c0_275, %c67_276] : memref<1x358xf32, #tpu.memory_space<vmem>>, vector<1x256xf32>
    %351 = vector.broadcast %106 : f32 to vector<1x256xf32>
    %352 = arith.mulf %351, %350 : vector<1x256xf32>
    %353 = arith.addf %345, %352 : vector<1x256xf32>
    %c0_277 = arith.constant 0 : index
    %c83 = arith.constant 83 : index
    %354 = vector.load %arg7[%c0_277, %c83] : memref<1x358xf32, #tpu.memory_space<vmem>>, vector<1x256xf32>
    %355 = vector.broadcast %64 : f32 to vector<1x256xf32>
    %356 = arith.mulf %355, %354 : vector<1x256xf32>
    %357 = arith.addf %349, %356 : vector<1x256xf32>
    %c0_278 = arith.constant 0 : index
    %c83_279 = arith.constant 83 : index
    %358 = vector.load %arg8[%c0_278, %c83_279] : memref<1x358xf32, #tpu.memory_space<vmem>>, vector<1x256xf32>
    %359 = vector.broadcast %113 : f32 to vector<1x256xf32>
    %360 = arith.mulf %359, %358 : vector<1x256xf32>
    %361 = arith.addf %353, %360 : vector<1x256xf32>
    %c0_280 = arith.constant 0 : index
    %c99 = arith.constant 99 : index
    %362 = vector.load %arg7[%c0_280, %c99] : memref<1x358xf32, #tpu.memory_space<vmem>>, vector<1x256xf32>
    %363 = vector.broadcast %71 : f32 to vector<1x256xf32>
    %364 = arith.mulf %363, %362 : vector<1x256xf32>
    %365 = arith.addf %357, %364 : vector<1x256xf32>
    %c0_281 = arith.constant 0 : index
    %c99_282 = arith.constant 99 : index
    %366 = vector.load %arg8[%c0_281, %c99_282] : memref<1x358xf32, #tpu.memory_space<vmem>>, vector<1x256xf32>
    %367 = vector.broadcast %120 : f32 to vector<1x256xf32>
    %368 = arith.mulf %367, %366 : vector<1x256xf32>
    %369 = arith.addf %361, %368 : vector<1x256xf32>
    %370 = arith.addf %365, %369 : vector<1x256xf32>
    %371 = arith.addf %249, %370 : vector<1x256xf32>
    %cst_283 = arith.constant 0.000000e+00 : f32
    %372 = vector.broadcast %cst_283 : f32 to vector<1x256xf32>
    %cst_284 = arith.constant 0.000000e+00 : f32
    %373 = vector.broadcast %cst_284 : f32 to vector<1x256xf32>
    %c0_285 = arith.constant 0 : index
    %c4_286 = arith.constant 4 : index
    %374 = vector.load %arg7[%c0_285, %c4_286] : memref<1x358xf32, #tpu.memory_space<vmem>>, vector<1x256xf32>
    %375 = vector.broadcast %30 : f32 to vector<1x256xf32>
    %376 = arith.mulf %375, %374 : vector<1x256xf32>
    %377 = arith.addf %372, %376 : vector<1x256xf32>
    %c0_287 = arith.constant 0 : index
    %c4_288 = arith.constant 4 : index
    %378 = vector.load %arg8[%c0_287, %c4_288] : memref<1x358xf32, #tpu.memory_space<vmem>>, vector<1x256xf32>
    %379 = vector.broadcast %79 : f32 to vector<1x256xf32>
    %380 = arith.mulf %379, %378 : vector<1x256xf32>
    %381 = arith.addf %373, %380 : vector<1x256xf32>
    %c0_289 = arith.constant 0 : index
    %c20_290 = arith.constant 20 : index
    %382 = vector.load %arg7[%c0_289, %c20_290] : memref<1x358xf32, #tpu.memory_space<vmem>>, vector<1x256xf32>
    %383 = vector.broadcast %37 : f32 to vector<1x256xf32>
    %384 = arith.mulf %383, %382 : vector<1x256xf32>
    %385 = arith.addf %377, %384 : vector<1x256xf32>
    %c0_291 = arith.constant 0 : index
    %c20_292 = arith.constant 20 : index
    %386 = vector.load %arg8[%c0_291, %c20_292] : memref<1x358xf32, #tpu.memory_space<vmem>>, vector<1x256xf32>
    %387 = vector.broadcast %86 : f32 to vector<1x256xf32>
    %388 = arith.mulf %387, %386 : vector<1x256xf32>
    %389 = arith.addf %381, %388 : vector<1x256xf32>
    %c0_293 = arith.constant 0 : index
    %c36_294 = arith.constant 36 : index
    %390 = vector.load %arg7[%c0_293, %c36_294] : memref<1x358xf32, #tpu.memory_space<vmem>>, vector<1x256xf32>
    %391 = vector.broadcast %44 : f32 to vector<1x256xf32>
    %392 = arith.mulf %391, %390 : vector<1x256xf32>
    %393 = arith.addf %385, %392 : vector<1x256xf32>
    %c0_295 = arith.constant 0 : index
    %c36_296 = arith.constant 36 : index
    %394 = vector.load %arg8[%c0_295, %c36_296] : memref<1x358xf32, #tpu.memory_space<vmem>>, vector<1x256xf32>
    %395 = vector.broadcast %93 : f32 to vector<1x256xf32>
    %396 = arith.mulf %395, %394 : vector<1x256xf32>
    %397 = arith.addf %389, %396 : vector<1x256xf32>
    %c0_297 = arith.constant 0 : index
    %c52 = arith.constant 52 : index
    %398 = vector.load %arg7[%c0_297, %c52] : memref<1x358xf32, #tpu.memory_space<vmem>>, vector<1x256xf32>
    %399 = vector.broadcast %51 : f32 to vector<1x256xf32>
    %400 = arith.mulf %399, %398 : vector<1x256xf32>
    %401 = arith.addf %393, %400 : vector<1x256xf32>
    %c0_298 = arith.constant 0 : index
    %c52_299 = arith.constant 52 : index
    %402 = vector.load %arg8[%c0_298, %c52_299] : memref<1x358xf32, #tpu.memory_space<vmem>>, vector<1x256xf32>
    %403 = vector.broadcast %100 : f32 to vector<1x256xf32>
    %404 = arith.mulf %403, %402 : vector<1x256xf32>
    %405 = arith.addf %397, %404 : vector<1x256xf32>
    %c0_300 = arith.constant 0 : index
    %c68 = arith.constant 68 : index
    %406 = vector.load %arg7[%c0_300, %c68] : memref<1x358xf32, #tpu.memory_space<vmem>>, vector<1x256xf32>
    %407 = vector.broadcast %58 : f32 to vector<1x256xf32>
    %408 = arith.mulf %407, %406 : vector<1x256xf32>
    %409 = arith.addf %401, %408 : vector<1x256xf32>
    %c0_301 = arith.constant 0 : index
    %c68_302 = arith.constant 68 : index
    %410 = vector.load %arg8[%c0_301, %c68_302] : memref<1x358xf32, #tpu.memory_space<vmem>>, vector<1x256xf32>
    %411 = vector.broadcast %107 : f32 to vector<1x256xf32>
    %412 = arith.mulf %411, %410 : vector<1x256xf32>
    %413 = arith.addf %405, %412 : vector<1x256xf32>
    %c0_303 = arith.constant 0 : index
    %c84 = arith.constant 84 : index
    %414 = vector.load %arg7[%c0_303, %c84] : memref<1x358xf32, #tpu.memory_space<vmem>>, vector<1x256xf32>
    %415 = vector.broadcast %65 : f32 to vector<1x256xf32>
    %416 = arith.mulf %415, %414 : vector<1x256xf32>
    %417 = arith.addf %409, %416 : vector<1x256xf32>
    %c0_304 = arith.constant 0 : index
    %c84_305 = arith.constant 84 : index
    %418 = vector.load %arg8[%c0_304, %c84_305] : memref<1x358xf32, #tpu.memory_space<vmem>>, vector<1x256xf32>
    %419 = vector.broadcast %114 : f32 to vector<1x256xf32>
    %420 = arith.mulf %419, %418 : vector<1x256xf32>
    %421 = arith.addf %413, %420 : vector<1x256xf32>
    %c0_306 = arith.constant 0 : index
    %c100 = arith.constant 100 : index
    %422 = vector.load %arg7[%c0_306, %c100] : memref<1x358xf32, #tpu.memory_space<vmem>>, vector<1x256xf32>
    %423 = vector.broadcast %72 : f32 to vector<1x256xf32>
    %424 = arith.mulf %423, %422 : vector<1x256xf32>
    %425 = arith.addf %417, %424 : vector<1x256xf32>
    %c0_307 = arith.constant 0 : index
    %c100_308 = arith.constant 100 : index
    %426 = vector.load %arg8[%c0_307, %c100_308] : memref<1x358xf32, #tpu.memory_space<vmem>>, vector<1x256xf32>
    %427 = vector.broadcast %121 : f32 to vector<1x256xf32>
    %428 = arith.mulf %427, %426 : vector<1x256xf32>
    %429 = arith.addf %421, %428 : vector<1x256xf32>
    %430 = arith.addf %425, %429 : vector<1x256xf32>
    %c4_309 = arith.constant 4 : index
    %c0_310 = arith.constant 0 : index
    %431 = vector.load %arg4[%c4_309, %c0_310] : memref<7x256xf32, #tpu.memory_space<vmem>>, vector<1x256xf32>
    %432 = arith.mulf %430, %431 : vector<1x256xf32>
    %433 = arith.addf %311, %432 : vector<1x256xf32>
    %cst_311 = arith.constant 0.000000e+00 : f32
    %434 = vector.broadcast %cst_311 : f32 to vector<1x256xf32>
    %cst_312 = arith.constant 0.000000e+00 : f32
    %435 = vector.broadcast %cst_312 : f32 to vector<1x256xf32>
    %c0_313 = arith.constant 0 : index
    %c5_314 = arith.constant 5 : index
    %436 = vector.load %arg7[%c0_313, %c5_314] : memref<1x358xf32, #tpu.memory_space<vmem>>, vector<1x256xf32>
    %437 = vector.broadcast %31 : f32 to vector<1x256xf32>
    %438 = arith.mulf %437, %436 : vector<1x256xf32>
    %439 = arith.addf %434, %438 : vector<1x256xf32>
    %c0_315 = arith.constant 0 : index
    %c5_316 = arith.constant 5 : index
    %440 = vector.load %arg8[%c0_315, %c5_316] : memref<1x358xf32, #tpu.memory_space<vmem>>, vector<1x256xf32>
    %441 = vector.broadcast %80 : f32 to vector<1x256xf32>
    %442 = arith.mulf %441, %440 : vector<1x256xf32>
    %443 = arith.addf %435, %442 : vector<1x256xf32>
    %c0_317 = arith.constant 0 : index
    %c21_318 = arith.constant 21 : index
    %444 = vector.load %arg7[%c0_317, %c21_318] : memref<1x358xf32, #tpu.memory_space<vmem>>, vector<1x256xf32>
    %445 = vector.broadcast %38 : f32 to vector<1x256xf32>
    %446 = arith.mulf %445, %444 : vector<1x256xf32>
    %447 = arith.addf %439, %446 : vector<1x256xf32>
    %c0_319 = arith.constant 0 : index
    %c21_320 = arith.constant 21 : index
    %448 = vector.load %arg8[%c0_319, %c21_320] : memref<1x358xf32, #tpu.memory_space<vmem>>, vector<1x256xf32>
    %449 = vector.broadcast %87 : f32 to vector<1x256xf32>
    %450 = arith.mulf %449, %448 : vector<1x256xf32>
    %451 = arith.addf %443, %450 : vector<1x256xf32>
    %c0_321 = arith.constant 0 : index
    %c37_322 = arith.constant 37 : index
    %452 = vector.load %arg7[%c0_321, %c37_322] : memref<1x358xf32, #tpu.memory_space<vmem>>, vector<1x256xf32>
    %453 = vector.broadcast %45 : f32 to vector<1x256xf32>
    %454 = arith.mulf %453, %452 : vector<1x256xf32>
    %455 = arith.addf %447, %454 : vector<1x256xf32>
    %c0_323 = arith.constant 0 : index
    %c37_324 = arith.constant 37 : index
    %456 = vector.load %arg8[%c0_323, %c37_324] : memref<1x358xf32, #tpu.memory_space<vmem>>, vector<1x256xf32>
    %457 = vector.broadcast %94 : f32 to vector<1x256xf32>
    %458 = arith.mulf %457, %456 : vector<1x256xf32>
    %459 = arith.addf %451, %458 : vector<1x256xf32>
    %c0_325 = arith.constant 0 : index
    %c53 = arith.constant 53 : index
    %460 = vector.load %arg7[%c0_325, %c53] : memref<1x358xf32, #tpu.memory_space<vmem>>, vector<1x256xf32>
    %461 = vector.broadcast %52 : f32 to vector<1x256xf32>
    %462 = arith.mulf %461, %460 : vector<1x256xf32>
    %463 = arith.addf %455, %462 : vector<1x256xf32>
    %c0_326 = arith.constant 0 : index
    %c53_327 = arith.constant 53 : index
    %464 = vector.load %arg8[%c0_326, %c53_327] : memref<1x358xf32, #tpu.memory_space<vmem>>, vector<1x256xf32>
    %465 = vector.broadcast %101 : f32 to vector<1x256xf32>
    %466 = arith.mulf %465, %464 : vector<1x256xf32>
    %467 = arith.addf %459, %466 : vector<1x256xf32>
    %c0_328 = arith.constant 0 : index
    %c69 = arith.constant 69 : index
    %468 = vector.load %arg7[%c0_328, %c69] : memref<1x358xf32, #tpu.memory_space<vmem>>, vector<1x256xf32>
    %469 = vector.broadcast %59 : f32 to vector<1x256xf32>
    %470 = arith.mulf %469, %468 : vector<1x256xf32>
    %471 = arith.addf %463, %470 : vector<1x256xf32>
    %c0_329 = arith.constant 0 : index
    %c69_330 = arith.constant 69 : index
    %472 = vector.load %arg8[%c0_329, %c69_330] : memref<1x358xf32, #tpu.memory_space<vmem>>, vector<1x256xf32>
    %473 = vector.broadcast %108 : f32 to vector<1x256xf32>
    %474 = arith.mulf %473, %472 : vector<1x256xf32>
    %475 = arith.addf %467, %474 : vector<1x256xf32>
    %c0_331 = arith.constant 0 : index
    %c85 = arith.constant 85 : index
    %476 = vector.load %arg7[%c0_331, %c85] : memref<1x358xf32, #tpu.memory_space<vmem>>, vector<1x256xf32>
    %477 = vector.broadcast %66 : f32 to vector<1x256xf32>
    %478 = arith.mulf %477, %476 : vector<1x256xf32>
    %479 = arith.addf %471, %478 : vector<1x256xf32>
    %c0_332 = arith.constant 0 : index
    %c85_333 = arith.constant 85 : index
    %480 = vector.load %arg8[%c0_332, %c85_333] : memref<1x358xf32, #tpu.memory_space<vmem>>, vector<1x256xf32>
    %481 = vector.broadcast %115 : f32 to vector<1x256xf32>
    %482 = arith.mulf %481, %480 : vector<1x256xf32>
    %483 = arith.addf %475, %482 : vector<1x256xf32>
    %c0_334 = arith.constant 0 : index
    %c101 = arith.constant 101 : index
    %484 = vector.load %arg7[%c0_334, %c101] : memref<1x358xf32, #tpu.memory_space<vmem>>, vector<1x256xf32>
    %485 = vector.broadcast %73 : f32 to vector<1x256xf32>
    %486 = arith.mulf %485, %484 : vector<1x256xf32>
    %487 = arith.addf %479, %486 : vector<1x256xf32>
    %c0_335 = arith.constant 0 : index
    %c101_336 = arith.constant 101 : index
    %488 = vector.load %arg8[%c0_335, %c101_336] : memref<1x358xf32, #tpu.memory_space<vmem>>, vector<1x256xf32>
    %489 = vector.broadcast %122 : f32 to vector<1x256xf32>
    %490 = arith.mulf %489, %488 : vector<1x256xf32>
    %491 = arith.addf %483, %490 : vector<1x256xf32>
    %492 = arith.addf %487, %491 : vector<1x256xf32>
    %c5_337 = arith.constant 5 : index
    %c0_338 = arith.constant 0 : index
    %493 = vector.load %arg4[%c5_337, %c0_338] : memref<7x256xf32, #tpu.memory_space<vmem>>, vector<1x256xf32>
    %494 = arith.mulf %492, %493 : vector<1x256xf32>
    %495 = arith.addf %371, %494 : vector<1x256xf32>
    %cst_339 = arith.constant 0.000000e+00 : f32
    %496 = vector.broadcast %cst_339 : f32 to vector<1x256xf32>
    %cst_340 = arith.constant 0.000000e+00 : f32
    %497 = vector.broadcast %cst_340 : f32 to vector<1x256xf32>
    %c0_341 = arith.constant 0 : index
    %c6_342 = arith.constant 6 : index
    %498 = vector.load %arg7[%c0_341, %c6_342] : memref<1x358xf32, #tpu.memory_space<vmem>>, vector<1x256xf32>
    %499 = vector.broadcast %32 : f32 to vector<1x256xf32>
    %500 = arith.mulf %499, %498 : vector<1x256xf32>
    %501 = arith.addf %496, %500 : vector<1x256xf32>
    %c0_343 = arith.constant 0 : index
    %c6_344 = arith.constant 6 : index
    %502 = vector.load %arg8[%c0_343, %c6_344] : memref<1x358xf32, #tpu.memory_space<vmem>>, vector<1x256xf32>
    %503 = vector.broadcast %81 : f32 to vector<1x256xf32>
    %504 = arith.mulf %503, %502 : vector<1x256xf32>
    %505 = arith.addf %497, %504 : vector<1x256xf32>
    %c0_345 = arith.constant 0 : index
    %c22_346 = arith.constant 22 : index
    %506 = vector.load %arg7[%c0_345, %c22_346] : memref<1x358xf32, #tpu.memory_space<vmem>>, vector<1x256xf32>
    %507 = vector.broadcast %39 : f32 to vector<1x256xf32>
    %508 = arith.mulf %507, %506 : vector<1x256xf32>
    %509 = arith.addf %501, %508 : vector<1x256xf32>
    %c0_347 = arith.constant 0 : index
    %c22_348 = arith.constant 22 : index
    %510 = vector.load %arg8[%c0_347, %c22_348] : memref<1x358xf32, #tpu.memory_space<vmem>>, vector<1x256xf32>
    %511 = vector.broadcast %88 : f32 to vector<1x256xf32>
    %512 = arith.mulf %511, %510 : vector<1x256xf32>
    %513 = arith.addf %505, %512 : vector<1x256xf32>
    %c0_349 = arith.constant 0 : index
    %c38_350 = arith.constant 38 : index
    %514 = vector.load %arg7[%c0_349, %c38_350] : memref<1x358xf32, #tpu.memory_space<vmem>>, vector<1x256xf32>
    %515 = vector.broadcast %46 : f32 to vector<1x256xf32>
    %516 = arith.mulf %515, %514 : vector<1x256xf32>
    %517 = arith.addf %509, %516 : vector<1x256xf32>
    %c0_351 = arith.constant 0 : index
    %c38_352 = arith.constant 38 : index
    %518 = vector.load %arg8[%c0_351, %c38_352] : memref<1x358xf32, #tpu.memory_space<vmem>>, vector<1x256xf32>
    %519 = vector.broadcast %95 : f32 to vector<1x256xf32>
    %520 = arith.mulf %519, %518 : vector<1x256xf32>
    %521 = arith.addf %513, %520 : vector<1x256xf32>
    %c0_353 = arith.constant 0 : index
    %c54 = arith.constant 54 : index
    %522 = vector.load %arg7[%c0_353, %c54] : memref<1x358xf32, #tpu.memory_space<vmem>>, vector<1x256xf32>
    %523 = vector.broadcast %53 : f32 to vector<1x256xf32>
    %524 = arith.mulf %523, %522 : vector<1x256xf32>
    %525 = arith.addf %517, %524 : vector<1x256xf32>
    %c0_354 = arith.constant 0 : index
    %c54_355 = arith.constant 54 : index
    %526 = vector.load %arg8[%c0_354, %c54_355] : memref<1x358xf32, #tpu.memory_space<vmem>>, vector<1x256xf32>
    %527 = vector.broadcast %102 : f32 to vector<1x256xf32>
    %528 = arith.mulf %527, %526 : vector<1x256xf32>
    %529 = arith.addf %521, %528 : vector<1x256xf32>
    %c0_356 = arith.constant 0 : index
    %c70 = arith.constant 70 : index
    %530 = vector.load %arg7[%c0_356, %c70] : memref<1x358xf32, #tpu.memory_space<vmem>>, vector<1x256xf32>
    %531 = vector.broadcast %60 : f32 to vector<1x256xf32>
    %532 = arith.mulf %531, %530 : vector<1x256xf32>
    %533 = arith.addf %525, %532 : vector<1x256xf32>
    %c0_357 = arith.constant 0 : index
    %c70_358 = arith.constant 70 : index
    %534 = vector.load %arg8[%c0_357, %c70_358] : memref<1x358xf32, #tpu.memory_space<vmem>>, vector<1x256xf32>
    %535 = vector.broadcast %109 : f32 to vector<1x256xf32>
    %536 = arith.mulf %535, %534 : vector<1x256xf32>
    %537 = arith.addf %529, %536 : vector<1x256xf32>
    %c0_359 = arith.constant 0 : index
    %c86 = arith.constant 86 : index
    %538 = vector.load %arg7[%c0_359, %c86] : memref<1x358xf32, #tpu.memory_space<vmem>>, vector<1x256xf32>
    %539 = vector.broadcast %67 : f32 to vector<1x256xf32>
    %540 = arith.mulf %539, %538 : vector<1x256xf32>
    %541 = arith.addf %533, %540 : vector<1x256xf32>
    %c0_360 = arith.constant 0 : index
    %c86_361 = arith.constant 86 : index
    %542 = vector.load %arg8[%c0_360, %c86_361] : memref<1x358xf32, #tpu.memory_space<vmem>>, vector<1x256xf32>
    %543 = vector.broadcast %116 : f32 to vector<1x256xf32>
    %544 = arith.mulf %543, %542 : vector<1x256xf32>
    %545 = arith.addf %537, %544 : vector<1x256xf32>
    %c0_362 = arith.constant 0 : index
    %c102 = arith.constant 102 : index
    %546 = vector.load %arg7[%c0_362, %c102] : memref<1x358xf32, #tpu.memory_space<vmem>>, vector<1x256xf32>
    %547 = vector.broadcast %74 : f32 to vector<1x256xf32>
    %548 = arith.mulf %547, %546 : vector<1x256xf32>
    %549 = arith.addf %541, %548 : vector<1x256xf32>
    %c0_363 = arith.constant 0 : index
    %c102_364 = arith.constant 102 : index
    %550 = vector.load %arg8[%c0_363, %c102_364] : memref<1x358xf32, #tpu.memory_space<vmem>>, vector<1x256xf32>
    %551 = vector.broadcast %123 : f32 to vector<1x256xf32>
    %552 = arith.mulf %551, %550 : vector<1x256xf32>
    %553 = arith.addf %545, %552 : vector<1x256xf32>
    %554 = arith.addf %549, %553 : vector<1x256xf32>
    %c6_365 = arith.constant 6 : index
    %c0_366 = arith.constant 0 : index
    %555 = vector.load %arg4[%c6_365, %c0_366] : memref<7x256xf32, #tpu.memory_space<vmem>>, vector<1x256xf32>
    %556 = arith.mulf %554, %555 : vector<1x256xf32>
    %557 = arith.addf %433, %556 : vector<1x256xf32>
    %558 = arith.addf %557, %495 : vector<1x256xf32>
    %559 = arith.negf %558 : vector<1x256xf32>
    %560 = math.exp %559 : vector<1x256xf32>
    %cst_367 = arith.constant 1.000000e+00 : f32
    %561 = vector.broadcast %cst_367 : f32 to vector<1x256xf32>
    %562 = arith.addf %561, %560 : vector<1x256xf32>
    %563 = arith.divf %561, %562 : vector<1x256xf32>
    %564 = vector.shape_cast %563 : vector<1x256xf32> to vector<1x1x256xf32>
    %565 = vector.broadcast %564 : vector<1x1x256xf32> to vector<1x4x256xf32>
    %566 = arith.mulf %15, %565 : vector<1x4x256xf32>
    %c0_368 = arith.constant 0 : index
    %c0_369 = arith.constant 0 : index
    %c0_370 = arith.constant 0 : index
    %567 = vector.load %arg6[%c0_368, %c0_369, %c0_370] : memref<1x4x256xf32, #tpu.memory_space<vmem>>, vector<1x4x256xf32>
    tpu.vector_store %arg6[%c0_368, %c0_369, %c0_370], %566 {strides = array<i32>} : memref<1x4x256xf32, #tpu.memory_space<vmem>>, vector<1x4x256xf32>,
    return
  }
  func.func @transform_0(%arg0: i32) -> (i32, i32, i32) {
    %c0_i32 = arith.constant 0 : i32
    %c0_i32_0 = arith.constant 0 : i32
    %c0_i32_1 = arith.constant 0 : i32
    return %arg0, %c0_i32, %c0_i32_0 : i32, i32, i32
  }
  func.func @transform_1(%arg0: i32) -> (i32, i32) {
    %c0_i32 = arith.constant 0 : i32
    %c0_i32_0 = arith.constant 0 : i32
    %c0_i32_1 = arith.constant 0 : i32
    return %c0_i32, %c0_i32_0 : i32, i32
  }
  func.func @transform_2(%arg0: i32) -> (i32, i32) {
    %c0_i32 = arith.constant 0 : i32
    %c0_i32_0 = arith.constant 0 : i32
    %c0_i32_1 = arith.constant 0 : i32
    return %c0_i32, %c0_i32_0 : i32, i32
  }
  func.func @transform_3(%arg0: i32) -> (i32, i32) {
    %c0_i32 = arith.constant 0 : i32
    %c0_i32_0 = arith.constant 0 : i32
    %c0_i32_1 = arith.constant 0 : i32
    return %c0_i32, %c0_i32_0 : i32, i32
  }
  func.func @transform_4(%arg0: i32) -> (i32, i32) {
    %c0_i32 = arith.constant 0 : i32
    %c0_i32_0 = arith.constant 0 : i32
    %c0_i32_1 = arith.constant 0 : i32
    return %c0_i32, %c0_i32_0 : i32, i32
  }
  func.func @transform_5(%arg0: i32) -> (i32, i32, i32) {
    %c0_i32 = arith.constant 0 : i32
    %c0_i32_0 = arith.constant 0 : i32
    %c0_i32_1 = arith.constant 0 : i32
    return %arg0, %c0_i32, %c0_i32_0 : i32, i32, i32
  }
}

</mosaic_0001>

<llo_original>
// kernel: cbam_pallas.1
$region0: #{cbam_pallas.1}
  #allocation0 [shape = 'u32[]', space=smem, size = 0x4, offset = 0x4, fixed_abs, tag = 'smem constant byte address 0x4 - core index']
  #allocation1 [shape = 'u32[144,128]{1,0:T(1,128)}', space=vmem, size = 0x12000, scoped, tag = 'internal scratch']
  #allocation2 [shape = 'f32[1,358]{1,0:T(1,128)}', space=vmem, size = 0x600, scoped, tag = 'scratch operand']
  #allocation3 [shape = 'f32[1,358]{1,0:T(1,128)}', space=vmem, size = 0x600, scoped, tag = 'scratch operand']
  %s0 = inlined_call_operand.vmem [shape: f32[2,4,256], index: 0, kind: input, shape index: {}]
  %s1 = inlined_call_operand.vmem [shape: f32[4,4], index: 1, kind: input, shape index: {}]
  %s2 = inlined_call_operand.vmem [shape: f32[1,4], index: 2, kind: input, shape index: {}]
  %s3 = inlined_call_operand.vmem [shape: f32[7,256], index: 3, kind: input, shape index: {}]
  %s4 = inlined_call_operand.vmem [shape: f32[2,49], index: 4, kind: input, shape index: {}]
  %s5 = inlined_call_operand.vmem [shape: f32[2,4,256], index: 5, kind: output, shape index: {}]
  %s6 = sld [smem:[#allocation0]]
  $region57: #{cbam_pallas.1} parent=0
    _
  %s8 = ssub.s32 1, %s6
  %s9 = scalar_select 0, %s8, %s6
  $region1: #{cbam_pallas.1} parent=0
    #allocation4 [shape = 'u8[1024]{0}', space=smem, size = 0x400, scoped, tag = 'input window, operand 4, single buffered']
    #allocation5 [shape = 's32[2]{0}', space=sflag, size = 0x8, scoped, tag = 'scoped memory for cbam_pallas.1']
    %10 = vsyncpa [#allocation5], 0
    loop: start=0, step=1, limit=4
    $region2: #{cbam_pallas.1} parent=1 // loop_pre_header
      _
    $region3: #{cbam_pallas.1} parent=1 // loop_header
      %s12 = sphi 0, %s16
      %p13 = scmp.ge.s32.totalorder %s12, 4
      %s22 = sphi 0, %s24
      %s25 = sphi 0, %s22
      %s26 = sphi 0, %s25
      %s42 = sphi 0, %s26
      %s46 = sphi 0, %s46
      %s48 = sphi 0, %s46
      %s49 = sphi 0, %s48
      %s63 = sphi 0, %s49
      %s67 = sphi 0, %s67
      %s69 = sphi 0, %s67
      %s70 = sphi 0, %s69
      %s84 = sphi 0, %s70
      %s88 = sphi 0, %s88
      %s90 = sphi 0, %s88
      %s91 = sphi 0, %s90
      %s105 = sphi 0, %s91
      %s109 = sphi 0, %s109
      %s111 = sphi 0, %s109
      %s112 = sphi 0, %s111
      %s126 = sphi 0, %s112
      %s132 = sphi 0, %s134
      %s135 = sphi 0, %s132
      %s136 = sphi 0, %s135
      %s152 = sphi 0, %s136
    $region4: #{cbam_pallas.1} parent=1 // loop_header_branch
      %15 = sbr.rel (%p13) target = $region8
    $region5: #{cbam_pallas.1} parent=1 // loop_body
      %s17 = ssub.s32 %s12, 1
      %s18 = ssub.s32 %s12, 2
      %s19 = sadd.s32 %s12, 1
      %s20 = ssub.s32 %s12, %s19
      %p21 = scmp.eq.s32.totalorder %s20, 0
      %s23 = sadd.s32 %s22, 1
      %s24 = scalar_select %p21, %s22, %s23
      %p27 = pneg %p21
      %p28 = scmp.eq.s32.totalorder %s12, 1
      %p29 = por %p27, %p28
      %p30 = scmp.ne.s32.totalorder %s22, %s25
      %p31 = scmp.eq.s32.totalorder %s12, 0
      %p32 = por %p30, %p31
      %p33 = scmp.ne.s32.totalorder %s22, %s25
      %p34 = scmp.eq.s32.totalorder %s17, 1
      %p35 = por %p33, %p34
      %p36 = scmp.ne.s32.totalorder %s25, %s26
      %p37 = scmp.eq.s32.totalorder %s17, 0
      %p38 = por %p36, %p37
      %p39 = scmp.ne.s32.totalorder %s25, %s26
      %p40 = scmp.eq.s32.totalorder %s18, 1
      %p41 = por %p39, %p40
      %p43 = scmp.ne.s32.totalorder %s26, %s42
      %p44 = scmp.eq.s32.totalorder %s18, 0
      %p45 = por %p43, %p44
      %s47 = sadd.s32 %s46, 1
      %p50 = scmp.eq.s32.totalorder %s12, 1
      %p51 = scmp.ne.s32.totalorder %s46, %s48
      %p52 = scmp.eq.s32.totalorder %s12, 0
      %p53 = por %p51, %p52
      %p54 = scmp.ne.s32.totalorder %s46, %s48
      %p55 = scmp.eq.s32.totalorder %s17, 1
      %p56 = por %p54, %p55
      %p57 = scmp.ne.s32.totalorder %s48, %s49
      %p58 = scmp.eq.s32.totalorder %s17, 0
      %p59 = por %p57, %p58
      %p60 = scmp.ne.s32.totalorder %s48, %s49
      %p61 = scmp.eq.s32.totalorder %s18, 1
      %p62 = por %p60, %p61
      %p64 = scmp.ne.s32.totalorder %s49, %s63
      %p65 = scmp.eq.s32.totalorder %s18, 0
      %p66 = por %p64, %p65
      %s68 = sadd.s32 %s67, 1
      %p71 = scmp.eq.s32.totalorder %s12, 1
      %p72 = scmp.ne.s32.totalorder %s67, %s69
      %p73 = scmp.eq.s32.totalorder %s12, 0
      %p74 = por %p72, %p73
      %p75 = scmp.ne.s32.totalorder %s67, %s69
      %p76 = scmp.eq.s32.totalorder %s17, 1
      %p77 = por %p75, %p76
      %p78 = scmp.ne.s32.totalorder %s69, %s70
      %p79 = scmp.eq.s32.totalorder %s17, 0
      %p80 = por %p78, %p79
      %p81 = scmp.ne.s32.totalorder %s69, %s70
      %p82 = scmp.eq.s32.totalorder %s18, 1
      %p83 = por %p81, %p82
      %p85 = scmp.ne.s32.totalorder %s70, %s84
      %p86 = scmp.eq.s32.totalorder %s18, 0
      %p87 = por %p85, %p86
      %s89 = sadd.s32 %s88, 1
      %p92 = scmp.eq.s32.totalorder %s12, 1
      %p93 = scmp.ne.s32.totalorder %s88, %s90
      %p94 = scmp.eq.s32.totalorder %s12, 0
      %p95 = por %p93, %p94
      %p96 = scmp.ne.s32.totalorder %s88, %s90
      %p97 = scmp.eq.s32.totalorder %s17, 1
      %p98 = por %p96, %p97
      %p99 = scmp.ne.s32.totalorder %s90, %s91
      %p100 = scmp.eq.s32.totalorder %s17, 0
      %p101 = por %p99, %p100
      %p102 = scmp.ne.s32.totalorder %s90, %s91
      %p103 = scmp.eq.s32.totalorder %s18, 1
      %p104 = por %p102, %p103
      %p106 = scmp.ne.s32.totalorder %s91, %s105
      %p107 = scmp.eq.s32.totalorder %s18, 0
      %p108 = por %p106, %p107
      %s110 = sadd.s32 %s109, 1
      %p113 = scmp.eq.s32.totalorder %s12, 1
      %p114 = scmp.ne.s32.totalorder %s109, %s111
      %p115 = scmp.eq.s32.totalorder %s12, 0
      %p116 = por %p114, %p115
      %p117 = scmp.ne.s32.totalorder %s109, %s111
      %p118 = scmp.eq.s32.totalorder %s17, 1
      %p119 = por %p117, %p118
      %p120 = scmp.ne.s32.totalorder %s111, %s112
      %p121 = scmp.eq.s32.totalorder %s17, 0
      %p122 = por %p120, %p121
      %p123 = scmp.ne.s32.totalorder %s111, %s112
      %p124 = scmp.eq.s32.totalorder %s18, 1
      %p125 = por %p123, %p124
      %p127 = scmp.ne.s32.totalorder %s112, %s126
      %p128 = scmp.eq.s32.totalorder %s18, 0
      %p129 = por %p127, %p128
      %s130 = ssub.s32 %s12, %s19
      %p131 = scmp.eq.s32.totalorder %s130, 0
      %s133 = sadd.s32 %s132, 1
      %s134 = scalar_select %p131, %s132, %s133
      %p137 = pneg %p131
      %p138 = scmp.eq.s32.totalorder %s12, 1
      %p139 = por %p137, %p138
      %p140 = scmp.ne.s32.totalorder %s132, %s135
      %p141 = scmp.eq.s32.totalorder %s12, 0
      %p142 = por %p140, %p141
      %p143 = scmp.ne.s32.totalorder %s132, %s135
      %p144 = scmp.eq.s32.totalorder %s17, 1
      %p145 = por %p143, %p144
      %p146 = scmp.ne.s32.totalorder %s135, %s136
      %p147 = scmp.eq.s32.totalorder %s17, 0
      %p148 = por %p146, %p147
      %p149 = scmp.ne.s32.totalorder %s135, %s136
      %p150 = scmp.eq.s32.totalorder %s18, 1
      %p151 = por %p149, %p150
      %p153 = scmp.ne.s32.totalorder %s136, %s152
      %p154 = scmp.eq.s32.totalorder %s18, 0
      %p155 = por %p153, %p154
      %p156 = scmp.le.s32.totalorder 1, %s12
      %p157 = scmp.lt.s32.totalorder %s12, 3
      %p158 = pnand %p156, %p157
      %p159 = pneg %p158
      // Predicated region
      $region9: #{cbam_pallas.1} parent=5 // pred_check
        _
      $region10: #{cbam_pallas.1} parent=5 // pred_check_branch
        %161 = sbr.rel (%p158) target = $region12
      $region11: #{cbam_pallas.1} parent=5 // pred_region
        %s162 = ssub.s32 %s12, 1
        // Predicated region
        $region13: #{cbam_pallas.1} parent=11 // pred_check
          %p163 = pneg %p59
        $region14: #{cbam_pallas.1} parent=11 // pred_check_branch
          %165 = sbr.rel (%p163) target = $region16
        $region15: #{cbam_pallas.1} parent=11 // pred_region
          _
        $region16: #{cbam_pallas.1} parent=11 // pred_fallthru
          _
        // Predicated region
        $region17: #{cbam_pallas.1} parent=11 // pred_check
          %p166 = pneg %p80
        $region18: #{cbam_pallas.1} parent=11 // pred_check_branch
          %168 = sbr.rel (%p166) target = $region20
        $region19: #{cbam_pallas.1} parent=11 // pred_region
          _
        $region20: #{cbam_pallas.1} parent=11 // pred_fallthru
          _
        // Predicated region
        $region21: #{cbam_pallas.1} parent=11 // pred_check
          %p169 = pneg %p101
        $region22: #{cbam_pallas.1} parent=11 // pred_check_branch
          %171 = sbr.rel (%p169) target = $region24
        $region23: #{cbam_pallas.1} parent=11 // pred_region
          _
        $region24: #{cbam_pallas.1} parent=11 // pred_fallthru
          _
        // Predicated region
        $region25: #{cbam_pallas.1} parent=11 // pred_check
          %p172 = pneg %p122
        $region26: #{cbam_pallas.1} parent=11 // pred_check_branch
          %174 = sbr.rel (%p172) target = $region28
        $region27: #{cbam_pallas.1} parent=11 // pred_region
          %s176 = ssub.s32 32, 32
          %177 = vsyncadd [#allocation5], %s176
          %s179 = sshll.u32 %s4, 4
          %s180 = int_to_ptr.vmem [resolvable:$true] %s179
          %182 = dma.vmem_to_smem %s180, 32, [#allocation4], [#allocation5]
        $region28: #{cbam_pallas.1} parent=11 // pred_fallthru
          _
      $region12: #{cbam_pallas.1} parent=5 // pred_fallthru
        _
      %p183 = scmp.lt.s32.totalorder %s12, 2
      // Predicated region
      $region29: #{cbam_pallas.1} parent=5 // pred_check
        %p184 = pneg %p183
      $region30: #{cbam_pallas.1} parent=5 // pred_check_branch
        %186 = sbr.rel (%p184) target = $region32
      $region31: #{cbam_pallas.1} parent=5 // pred_region
        // Predicated region
        $region33: #{cbam_pallas.1} parent=31 // pred_check
          %p187 = pneg %p32
        $region34: #{cbam_pallas.1} parent=31 // pred_check_branch
          %189 = sbr.rel (%p187) target = $region36
        $region35: #{cbam_pallas.1} parent=31 // pred_region
          %p190 = scmp.lt.s32.totalorder %s12, 1
          %s191 = scalar_select %p190, %s12, 1
          %s192 = smul.addr %s191, 2
          %s193 = smul.addr %s192, 4
          %s194 = scalar_lea.vmem %s0, %s193
        $region36: #{cbam_pallas.1} parent=31 // pred_fallthru
          _
      $region32: #{cbam_pallas.1} parent=5 // pred_fallthru
        _
      %p195 = scmp.le.s32.totalorder 1, %s12
      %p196 = scmp.lt.s32.totalorder %s12, 3
      %p197 = pnand %p195, %p196
      %p198 = pneg %p197
      // Predicated region
      $region37: #{cbam_pallas.1} parent=5 // pred_check
        _
      $region38: #{cbam_pallas.1} parent=5 // pred_check_branch
        %200 = sbr.rel (%p197) target = $region40
      $region39: #{cbam_pallas.1} parent=5 // pred_region
        %s201 = ssub.s32 %s12, 1
        // Predicated region
        $region41: #{cbam_pallas.1} parent=39 // pred_check
          %p202 = pneg %p122
        $region42: #{cbam_pallas.1} parent=39 // pred_check_branch
          %204 = sbr.rel (%p202) target = $region44
        $region43: #{cbam_pallas.1} parent=39 // pred_region
          %205 = dma.done [#allocation5], 32
        $region44: #{cbam_pallas.1} parent=39 // pred_fallthru
          _
        %206 = sfence
        %p207 = scmp.lt.s32.totalorder %s17, 1
        %s208 = scalar_select %p207, %s17, 1
        %s209 = smul.addr %s208, 2
        %s210 = smul.addr %s209, 4
        %s211 = scalar_lea.vmem %s0, %s210
        %p212 = pneg %p38
        %p213 = pneg %p35
        %p214 = pneg %p59
        %p215 = pneg %p56
        %p216 = pneg %p80
        %p217 = pneg %p77
        %p218 = pneg %p101
        %p219 = pneg %p98
        %p220 = pneg %p122
        %p221 = pneg %p119
        %p222 = pneg %p148
        %p223 = pneg %p145
        %p224 = scmp.lt.s32.totalorder %s17, 1
        %s225 = scalar_select %p224, %s17, 1
        %s226 = smul.addr %s225, 2
        %s227 = smul.addr %s226, 4
        %s228 = scalar_lea.vmem %s5, %s227
        %p229 = scmp.lt.s32.totalorder %s17, 1
        %s230 = scalar_select %p229, %s17, 1
        %s231 = smul.addr %s230, 2
        %s232 = smul.addr %s231, 4
        %s233 = scalar_lea.vmem %s0, %s232
        %p234 = scmp.lt.s32.totalorder %s17, 1
        %s235 = scalar_select %p234, %s17, 1
        %s236 = smul.addr %s235, 2
        %s237 = smul.addr %s236, 4
        %s238 = scalar_lea.vmem %s5, %s237
        %v239 = vld [vmem:[%s233] sm:$0xff]
        %v241 = vcombine.high %v239, %v239
        %vm243 = vcmask 1043456
        %v244 = vsel %vm243, %v239, 0.0
        %v245 = vsel %vm243, %v241, 0.0
        %v246 = vadd.f32 %v244, %v245
        %247 = vadd.xlane.f32.xlu0 %v246
        %v248 = vpop.xlane.xlu0 %247
        %v249 = vrcp.pop 256.0
        %v250 = vmul.f32 %v248, %v249
        %v251 = vld [vmem:[%s1] sm:$0xf]
        %v252 = vld [vmem:[%s2] sm:$0x1]
        %v254 = vlaneseq
        %v255 = vand.u32 %v254, 127
        %v256 = vlaneseq
        %v257 = vshrl.u32 %v256, 7
        %v258 = vsub.s32 %v255, %v257
        %v259 = vrot.slane %v250, %v258
        %vm260 = vcmask 31744
        %v261 = vsel %vm260, %v259, 0
        %v264 = vsel %vm243, %v251, 0
        %266 = vmatprep.subr.mxu0 0.0
        %267 = vmatpush1.msra.mxu0 %v264
        %268 = vmatprep.subr.mxu0 0.0
        %269 = vmatpush1.msra.mxu0 0.0
        %270 = vmatprep.subr.mxu0 0.0
        %271 = vmatpush1.msra.mxu0 0.0
        %272 = vmatprep.subr.mxu0 0.0
        %273 = vmatpush1.msra.mxu0 0.0
        %274 = vmatprep.subr.mxu0 0.0
        %275 = vmatpush1.msra.mxu0 0.0
        %276 = vmatprep.subr.mxu0 0.0
        %277 = vmatpush1.msra.mxu0 0.0
        %278 = vmatprep.subr.mxu0 0.0
        %279 = vmatpush1.msra.mxu0 0.0
        %280 = vmatprep.subr.mxu0 0.0
        %281 = vmatpush1.msra.mxu0 0.0
        %282 = vmatprep.subr.mxu0 0.0
        %283 = vmatpush1.msra.mxu0 0.0
        %284 = vmatprep.subr.mxu0 0.0
        %285 = vmatpush1.msra.mxu0 0.0
        %286 = vmatprep.subr.mxu0 0.0
        %287 = vmatpush1.msra.mxu0 0.0
        %288 = vmatprep.subr.mxu0 0.0
        %289 = vmatpush1.msra.mxu0 0.0
        %290 = vmatprep.subr.mxu0 0.0
        %291 = vmatpush1.msra.mxu0 0.0
        %292 = vmatprep.subr.mxu0 0.0
        %293 = vmatpush1.msra.mxu0 0.0
        %294 = vmatprep.subr.mxu0 0.0
        %295 = vmatpush1.msra.mxu0 0.0
        %296 = vmatprep.subr.mxu0 0.0
        %297 = vmatpush1.msra.mxu0 0.0
        %298 = vmatprep.subr.mxu0 0.0
        %299 = vmatpush1.msra.mxu0 0.0
        %300 = vmatprep.subr.mxu0 0.0
        %301 = vmatpush1.msra.mxu0 0.0
        %302 = vmatprep.subr.mxu0 0.0
        %303 = vmatpush1.msra.mxu0 0.0
        %304 = vmatprep.subr.mxu0 0.0
        %305 = vmatpush1.msra.mxu0 0.0
        %306 = vmatprep.subr.mxu0 0.0
        %307 = vmatpush1.msra.mxu0 0.0
        %308 = vmatprep.subr.mxu0 0.0
        %309 = vmatpush1.msra.mxu0 0.0
        %310 = vmatprep.subr.mxu0 0.0
        %311 = vmatpush1.msra.mxu0 0.0
        %312 = vmatprep.subr.mxu0 0.0
        %313 = vmatpush1.msra.mxu0 0.0
        %314 = vmatprep.subr.mxu0 0.0
        %315 = vmatpush1.msra.mxu0 0.0
        %316 = vmatprep.subr.mxu0 0.0
        %317 = vmatpush1.msra.mxu0 0.0
        %318 = vmatprep.subr.mxu0 0.0
        %319 = vmatpush1.msra.mxu0 0.0
        %320 = vmatprep.subr.mxu0 0.0
        %321 = vmatpush1.msra.mxu0 0.0
        %322 = vmatprep.subr.mxu0 0.0
        %323 = vmatpush1.msra.mxu0 0.0
        %324 = vmatprep.subr.mxu0 0.0
        %325 = vmatpush1.msra.mxu0 0.0
        %326 = vmatprep.subr.mxu0 0.0
        %327 = vmatpush1.msra.mxu0 0.0
        %328 = vmatprep.subr.mxu0 0.0
        %329 = vmatpush1.msra.mxu0 0.0
        %330 = vmatprep.mubr.f32.mxu0 0.0
        %331 = vmatmul.mubr.f32.gmra.mrb[0].mxu0 %v261
        %v332 = vpop.f32.mrb[0].mxu0
        %v333 = vadd.f32 %v252, %v332
        %v334 = vpop.f32.mrb[0].mxu0
        %335 = vdwg.mxu0
        %v336 = vxor.u32 %v333, 2147483648
        %v337 = vmul.f32 %v336, 1.442695
        %v338 = vpow.pop %v337
        %v339 = vadd.f32 %v338, 1.0
        %v340 = vrcp.pop %v339
        %v341 = vmul.f32 1.0, %v340
        %v342 = vlaneseq
        %v343 = vshrl.u32 %v342, 7
        %v344 = vsub.s32 0, %v343
        %v345 = vrot.slane %v341, %v344
        %347 = vbcast.lane.b32.xlu0 %v345, 256
        %v348 = vpop.permute.xlu0 %347
        %v351 = vunpack.c.l.s4 839922192
        %v352 = vunpack.c.0.s8 %v351
        %v353 = vlaneseq
        %v354 = vshrl.u32 %v353, 7
        %v355 = vsub.s32 %v352, %v354
        %v356 = vrot.slane %v348, %v355
        %v358 = vmul.f32 %v239, %v356
        %v360 = vcombine.high %v358, %v358
        %v362 = vsel %vm243, %v358, 0.0
        %v363 = vrot.slane %v362, 4
        %v364 = vadd.f32 %v362, %v363
        %v365 = vrot.slane %v364, 2
        %v366 = vadd.f32 %v364, %v365
        %v367 = vrot.slane %v366, 1
        %v368 = vadd.f32 %v366, %v367
        %v369 = vsel %vm243, %v360, 0.0
        %v370 = vrot.slane %v369, 4
        %v371 = vadd.f32 %v369, %v370
        %v372 = vrot.slane %v371, 2
        %v373 = vadd.f32 %v371, %v372
        %v374 = vrot.slane %v373, 1
        %v375 = vadd.f32 %v373, %v374
        %v376 = vrcp.pop 4.0
        %v377 = vmul.f32 %v368, %v376
        %v378 = vmul.f32 %v375, %v376
        %v379 = vsel %vm243, %v358, -inf
        %v380 = vrot.slane %v379, 4
        %v381 = vmax.f32 %v379, %v380
        %v382 = vrot.slane %v381, 2
        %v383 = vmax.f32 %v381, %v382
        %v384 = vrot.slane %v383, 1
        %v385 = vmax.f32 %v383, %v384
        %v386 = vsel %vm243, %v360, -inf
        %v387 = vrot.slane %v386, 4
        %v388 = vmax.f32 %v386, %v387
        %v389 = vrot.slane %v388, 2
        %v390 = vmax.f32 %v388, %v389
        %v391 = vrot.slane %v390, 1
        %v392 = vmax.f32 %v390, %v391
        %v393 = vlaneseq
        %vm394 = vcmp.ge.s32.totalorder %v393, 0
        %vm395 = vcmp.lt.s32.totalorder %v393, 358
        %vm396 = vmand %vm394, %vm395
        %397 = vst.msk [vmem:[#allocation2] sm:$0x7] %vm396, 0.0
        %398 = vst.msk [vmem:[#allocation3] sm:$0x7] %vm396, 0.0
        %v401 = vcombine.low %v377, %v378
        %v403 = vunpack.c.l.s4 1966171168
        %v404 = vunpack.c.0.s8 %v403
        %v405 = vlaneseq
        %v406 = vshrl.u32 %v405, 7
        %v407 = vsub.s32 %v404, %v406
        %v408 = vrot.slane %v401, %v407
        %v410 = vunpack.c.l.s4 1966171168
        %v411 = vunpack.c.0.s8 %v410
        %v412 = vlaneseq
        %v413 = vshrl.u32 %v412, 7
        %v414 = vsub.s32 %v411, %v413
        %v415 = vrot.slane %v408, %v414
        %416 = vrot.lane.b32.xlu0 %v415, 51
        %v417 = vpop.permute.xlu0 %416
        %v418 = vrot.slane %v417, 7
        %vm419 = vcmask 416768
        %v420 = vsel %vm419, %v418, %v417
        %vm422 = vcmp.ge.s32.totalorder %v393, 51
        %vm423 = vcmp.lt.s32.totalorder %v393, 307
        %vm424 = vmand %vm422, %vm423
        %425 = vst.msk [vmem:[#allocation2] sm:$0x7] %vm424, %v420
        %v428 = vcombine.low %v385, %v392
        %v430 = vunpack.c.l.s4 1966171168
        %v431 = vunpack.c.0.s8 %v430
        %v432 = vlaneseq
        %v433 = vshrl.u32 %v432, 7
        %v434 = vsub.s32 %v431, %v433
        %v435 = vrot.slane %v428, %v434
        %v437 = vunpack.c.l.s4 1966171168
        %v438 = vunpack.c.0.s8 %v437
        %v439 = vlaneseq
        %v440 = vshrl.u32 %v439, 7
        %v441 = vsub.s32 %v438, %v440
        %v442 = vrot.slane %v435, %v441
        %443 = vrot.lane.b32.xlu0 %v442, 51
        %v444 = vpop.permute.xlu0 %443
        %v445 = vrot.slane %v444, 7
        %v446 = vsel %vm419, %v445, %v444
        %448 = vst.msk [vmem:[#allocation3] sm:$0x7] %vm424, %v446
        %s449 = sld [smem:[#allocation4]]
        %s450 = sld [smem:[#allocation4 + $0x1]]
        %s451 = sld [smem:[#allocation4 + $0x2]]
        %s452 = sld [smem:[#allocation4 + $0x3]]
        %s453 = sld [smem:[#allocation4 + $0x4]]
        %s454 = sld [smem:[#allocation4 + $0x5]]
        %s455 = sld [smem:[#allocation4 + $0x6]]
        %s456 = sld [smem:[#allocation4 + $0x7]]
        %s457 = sld [smem:[#allocation4 + $0x8]]
        %s458 = sld [smem:[#allocation4 + $0x9]]
        %s459 = sld [smem:[#allocation4 + $0xa]]
        %s460 = sld [smem:[#allocation4 + $0xb]]
        %s461 = sld [smem:[#allocation4 + $0xc]]
        %s462 = sld [smem:[#allocation4 + $0xd]]
        %s463 = sld [smem:[#allocation4 + $0xe]]
        %s464 = sld [smem:[#allocation4 + $0xf]]
        %s465 = sld [smem:[#allocation4 + $0x10]]
        %s466 = sld [smem:[#allocation4 + $0x11]]
        %s467 = sld [smem:[#allocation4 + $0x12]]
        %s468 = sld [smem:[#allocation4 + $0x13]]
        %s469 = sld [smem:[#allocation4 + $0x14]]
        %s470 = sld [smem:[#allocation4 + $0x15]]
        %s471 = sld [smem:[#allocation4 + $0x16]]
        %s472 = sld [smem:[#allocation4 + $0x17]]
        %s473 = sld [smem:[#allocation4 + $0x18]]
        %s474 = sld [smem:[#allocation4 + $0x19]]
        %s475 = sld [smem:[#allocation4 + $0x1a]]
        %s476 = sld [smem:[#allocation4 + $0x1b]]
        %s477 = sld [smem:[#allocation4 + $0x1c]]
        %s478 = sld [smem:[#allocation4 + $0x1d]]
        %s479 = sld [smem:[#allocation4 + $0x1e]]
        %s480 = sld [smem:[#allocation4 + $0x1f]]
        %s481 = sld [smem:[#allocation4 + $0x20]]
        %s482 = sld [smem:[#allocation4 + $0x21]]
        %s483 = sld [smem:[#allocation4 + $0x22]]
        %s484 = sld [smem:[#allocation4 + $0x23]]
        %s485 = sld [smem:[#allocation4 + $0x24]]
        %s486 = sld [smem:[#allocation4 + $0x25]]
        %s487 = sld [smem:[#allocation4 + $0x26]]
        %s488 = sld [smem:[#allocation4 + $0x27]]
        %s489 = sld [smem:[#allocation4 + $0x28]]
        %s490 = sld [smem:[#allocation4 + $0x29]]
        %s491 = sld [smem:[#allocation4 + $0x2a]]
        %s492 = sld [smem:[#allocation4 + $0x2b]]
        %s493 = sld [smem:[#allocation4 + $0x2c]]
        %s494 = sld [smem:[#allocation4 + $0x2d]]
        %s495 = sld [smem:[#allocation4 + $0x2e]]
        %s496 = sld [smem:[#allocation4 + $0x2f]]
        %s497 = sld [smem:[#allocation4 + $0x30]]
        %s498 = sld [smem:[#allocation4 + $0x80]]
        %s499 = sld [smem:[#allocation4 + $0x81]]
        %s500 = sld [smem:[#allocation4 + $0x82]]
        %s501 = sld [smem:[#allocation4 + $0x83]]
        %s502 = sld [smem:[#allocation4 + $0x84]]
        %s503 = sld [smem:[#allocation4 + $0x85]]
        %s504 = sld [smem:[#allocation4 + $0x86]]
        %s505 = sld [smem:[#allocation4 + $0x87]]
        %s506 = sld [smem:[#allocation4 + $0x88]]
        %s507 = sld [smem:[#allocation4 + $0x89]]
        %s508 = sld [smem:[#allocation4 + $0x8a]]
        %s509 = sld [smem:[#allocation4 + $0x8b]]
        %s510 = sld [smem:[#allocation4 + $0x8c]]
        %s511 = sld [smem:[#allocation4 + $0x8d]]
        %s512 = sld [smem:[#allocation4 + $0x8e]]
        %s513 = sld [smem:[#allocation4 + $0x8f]]
        %s514 = sld [smem:[#allocation4 + $0x90]]
        %s515 = sld [smem:[#allocation4 + $0x91]]
        %s516 = sld [smem:[#allocation4 + $0x92]]
        %s517 = sld [smem:[#allocation4 + $0x93]]
        %s518 = sld [smem:[#allocation4 + $0x94]]
        %s519 = sld [smem:[#allocation4 + $0x95]]
        %s520 = sld [smem:[#allocation4 + $0x96]]
        %s521 = sld [smem:[#allocation4 + $0x97]]
        %s522 = sld [smem:[#allocation4 + $0x98]]
        %s523 = sld [smem:[#allocation4 + $0x99]]
        %s524 = sld [smem:[#allocation4 + $0x9a]]
        %s525 = sld [smem:[#allocation4 + $0x9b]]
        %s526 = sld [smem:[#allocation4 + $0x9c]]
        %s527 = sld [smem:[#allocation4 + $0x9d]]
        %s528 = sld [smem:[#allocation4 + $0x9e]]
        %s529 = sld [smem:[#allocation4 + $0x9f]]
        %s530 = sld [smem:[#allocation4 + $0xa0]]
        %s531 = sld [smem:[#allocation4 + $0xa1]]
        %s532 = sld [smem:[#allocation4 + $0xa2]]
        %s533 = sld [smem:[#allocation4 + $0xa3]]
        %s534 = sld [smem:[#allocation4 + $0xa4]]
        %s535 = sld [smem:[#allocation4 + $0xa5]]
        %s536 = sld [smem:[#allocation4 + $0xa6]]
        %s537 = sld [smem:[#allocation4 + $0xa7]]
        %s538 = sld [smem:[#allocation4 + $0xa8]]
        %s539 = sld [smem:[#allocation4 + $0xa9]]
        %s540 = sld [smem:[#allocation4 + $0xaa]]
        %s541 = sld [smem:[#allocation4 + $0xab]]
        %s542 = sld [smem:[#allocation4 + $0xac]]
        %s543 = sld [smem:[#allocation4 + $0xad]]
        %s544 = sld [smem:[#allocation4 + $0xae]]
        %s545 = sld [smem:[#allocation4 + $0xaf]]
        %s546 = sld [smem:[#allocation4 + $0xb0]]
        %v547 = vld [vmem:[#allocation2] sm:$0x3]
        %v548 = vstv %s449
        %v549 = vmul.f32 %v548, %v547
        %v550 = vadd.f32 %v549, 0.0
        %v551 = vld [vmem:[#allocation3] sm:$0x3]
        %v552 = vstv %s498
        %v553 = vmul.f32 %v552, %v551
        %v554 = vadd.f32 %v553, 0.0
        %v555 = vld [vmem:[#allocation2] sm:$0x7]
        %v556 = vstv %s456
        %v557 = vmul.f32 %v556, %v555
        %559 = vrot.lane.b32.xlu0 %v557, 112
        %v560 = vpop.permute.xlu0 %559
        %v561 = vrot.slane %v560, 1
        %vm562 = vcmask 916480
        %v563 = vsel %vm562, %v560, %v561
        %v565 = vadd.f32 %v550, %v563
        %v566 = vld [vmem:[#allocation3] sm:$0x7]
        %v567 = vstv %s505
        %v568 = vmul.f32 %v567, %v566
        %570 = vrot.lane.b32.xlu0 %v568, 112
        %v571 = vpop.permute.xlu0 %570
        %v572 = vrot.slane %v571, 1
        %v573 = vsel %vm562, %v571, %v572
        %v575 = vadd.f32 %v554, %v573
        %v576 = vstv %s463
        %v577 = vmul.f32 %v576, %v555
        %579 = vrot.lane.b32.xlu0 %v577, 96
        %v580 = vpop.permute.xlu0 %579
        %v581 = vrot.slane %v580, 1
        %vm582 = vcmask 785408
        %v583 = vsel %vm582, %v580, %v581
        %v585 = vadd.f32 %v565, %v583
        %v586 = vstv %s512
        %v587 = vmul.f32 %v586, %v566
        %589 = vrot.lane.b32.xlu0 %v587, 96
        %v590 = vpop.permute.xlu0 %589
        %v591 = vrot.slane %v590, 1
        %v592 = vsel %vm582, %v590, %v591
        %v594 = vadd.f32 %v575, %v592
        %v595 = vstv %s470
        %v596 = vmul.f32 %v595, %v555
        %598 = vrot.lane.b32.xlu0 %v596, 80
        %v599 = vpop.permute.xlu0 %598
        %v600 = vrot.slane %v599, 1
        %vm601 = vcmask 654336
        %v602 = vsel %vm601, %v599, %v600
        %v604 = vadd.f32 %v585, %v602
        %v605 = vstv %s519
        %v606 = vmul.f32 %v605, %v566
        %608 = vrot.lane.b32.xlu0 %v606, 80
        %v609 = vpop.permute.xlu0 %608
        %v610 = vrot.slane %v609, 1
        %v611 = vsel %vm601, %v609, %v610
        %v613 = vadd.f32 %v594, %v611
        %v614 = vstv %s477
        %v615 = vmul.f32 %v614, %v555
        %617 = vrot.lane.b32.xlu0 %v615, 64
        %v618 = vpop.permute.xlu0 %617
        %v619 = vrot.slane %v618, 1
        %vm620 = vcmask 523264
        %v621 = vsel %vm620, %v618, %v619
        %v623 = vadd.f32 %v604, %v621
        %v624 = vstv %s526
        %v625 = vmul.f32 %v624, %v566
        %627 = vrot.lane.b32.xlu0 %v625, 64
        %v628 = vpop.permute.xlu0 %627
        %v629 = vrot.slane %v628, 1
        %v630 = vsel %vm620, %v628, %v629
        %v632 = vadd.f32 %v613, %v630
        %v633 = vstv %s484
        %v634 = vmul.f32 %v633, %v555
        %636 = vrot.lane.b32.xlu0 %v634, 48
        %v637 = vpop.permute.xlu0 %636
        %v638 = vrot.slane %v637, 1
        %vm639 = vcmask 392192
        %v640 = vsel %vm639, %v637, %v638
        %v642 = vadd.f32 %v623, %v640
        %v643 = vstv %s533
        %v644 = vmul.f32 %v643, %v566
        %646 = vrot.lane.b32.xlu0 %v644, 48
        %v647 = vpop.permute.xlu0 %646
        %v648 = vrot.slane %v647, 1
        %v649 = vsel %vm639, %v647, %v648
        %v651 = vadd.f32 %v632, %v649
        %v652 = vstv %s491
        %v653 = vmul.f32 %v652, %v555
        %655 = vrot.lane.b32.xlu0 %v653, 32
        %v656 = vpop.permute.xlu0 %655
        %v657 = vrot.slane %v656, 1
        %vm658 = vcmask 261120
        %v659 = vsel %vm658, %v656, %v657
        %v661 = vadd.f32 %v642, %v659
        %v662 = vstv %s540
        %v663 = vmul.f32 %v662, %v566
        %665 = vrot.lane.b32.xlu0 %v663, 32
        %v666 = vpop.permute.xlu0 %665
        %v667 = vrot.slane %v666, 1
        %v668 = vsel %vm658, %v666, %v667
        %v670 = vadd.f32 %v651, %v668
        %v671 = vadd.f32 %v661, %v670
        %v672 = vld [vmem:[%s3] ss:$8 sm:$0x3]
        %v673 = vmul.f32 %v671, %v672
        %v674 = vadd.f32 %v673, 0.0
        %v675 = vstv %s450
        %v676 = vmul.f32 %v675, %v555
        %v677 = vadd.f32 %v676, 0.0
        %v678 = vstv %s499
        %v679 = vmul.f32 %v678, %v566
        %v680 = vadd.f32 %v679, 0.0
        %v681 = vstv %s457
        %v682 = vmul.f32 %v681, %v555
        %684 = vrot.lane.b32.xlu0 %v682, 112
        %v685 = vpop.permute.xlu0 %684
        %v686 = vrot.slane %v685, 1
        %v687 = vsel %vm562, %v685, %v686
        %v689 = vadd.f32 %v677, %v687
        %v690 = vstv %s506
        %v691 = vmul.f32 %v690, %v566
        %693 = vrot.lane.b32.xlu0 %v691, 112
        %v694 = vpop.permute.xlu0 %693
        %v695 = vrot.slane %v694, 1
        %v696 = vsel %vm562, %v694, %v695
        %v698 = vadd.f32 %v680, %v696
        %v699 = vstv %s464
        %v700 = vmul.f32 %v699, %v555
        %702 = vrot.lane.b32.xlu0 %v700, 96
        %v703 = vpop.permute.xlu0 %702
        %v704 = vrot.slane %v703, 1
        %v705 = vsel %vm582, %v703, %v704
        %v707 = vadd.f32 %v689, %v705
        %v708 = vstv %s513
        %v709 = vmul.f32 %v708, %v566
        %711 = vrot.lane.b32.xlu0 %v709, 96
        %v712 = vpop.permute.xlu0 %711
        %v713 = vrot.slane %v712, 1
        %v714 = vsel %vm582, %v712, %v713
        %v716 = vadd.f32 %v698, %v714
        %v717 = vstv %s471
        %v718 = vmul.f32 %v717, %v555
        %720 = vrot.lane.b32.xlu0 %v718, 80
        %v721 = vpop.permute.xlu0 %720
        %v722 = vrot.slane %v721, 1
        %v723 = vsel %vm601, %v721, %v722
        %v725 = vadd.f32 %v707, %v723
        %v726 = vstv %s520
        %v727 = vmul.f32 %v726, %v566
        %729 = vrot.lane.b32.xlu0 %v727, 80
        %v730 = vpop.permute.xlu0 %729
        %v731 = vrot.slane %v730, 1
        %v732 = vsel %vm601, %v730, %v731
        %v734 = vadd.f32 %v716, %v732
        %v735 = vstv %s478
        %v736 = vmul.f32 %v735, %v555
        %738 = vrot.lane.b32.xlu0 %v736, 64
        %v739 = vpop.permute.xlu0 %738
        %v740 = vrot.slane %v739, 1
        %v741 = vsel %vm620, %v739, %v740
        %v743 = vadd.f32 %v725, %v741
        %v744 = vstv %s527
        %v745 = vmul.f32 %v744, %v566
        %747 = vrot.lane.b32.xlu0 %v745, 64
        %v748 = vpop.permute.xlu0 %747
        %v749 = vrot.slane %v748, 1
        %v750 = vsel %vm620, %v748, %v749
        %v752 = vadd.f32 %v734, %v750
        %v753 = vstv %s485
        %v754 = vmul.f32 %v753, %v555
        %756 = vrot.lane.b32.xlu0 %v754, 48
        %v757 = vpop.permute.xlu0 %756
        %v758 = vrot.slane %v757, 1
        %v759 = vsel %vm639, %v757, %v758
        %v761 = vadd.f32 %v743, %v759
        %v762 = vstv %s534
        %v763 = vmul.f32 %v762, %v566
        %765 = vrot.lane.b32.xlu0 %v763, 48
        %v766 = vpop.permute.xlu0 %765
        %v767 = vrot.slane %v766, 1
        %v768 = vsel %vm639, %v766, %v767
        %v770 = vadd.f32 %v752, %v768
        %v771 = vstv %s492
        %v772 = vmul.f32 %v771, %v555
        %774 = vrot.lane.b32.xlu0 %v772, 32
        %v775 = vpop.permute.xlu0 %774
        %v776 = vrot.slane %v775, 1
        %v777 = vsel %vm658, %v775, %v776
        %v779 = vadd.f32 %v761, %v777
        %v780 = vstv %s541
        %v781 = vmul.f32 %v780, %v566
        %783 = vrot.lane.b32.xlu0 %v781, 32
        %v784 = vpop.permute.xlu0 %783
        %v785 = vrot.slane %v784, 1
        %v786 = vsel %vm658, %v784, %v785
        %v788 = vadd.f32 %v770, %v786
        %v789 = vadd.f32 %v779, %v788
        %s790 = scalar_lea.vmem %s3, 1
        %v791 = vld [vmem:[%s790] ss:$8 sm:$0x3]
        %793 = vrot.lane.b32.xlu0 %v791, 1
        %v794 = vpop.permute.xlu0 %793
        %v795 = vrot.slane %v794, 7
        %vm796 = vcmask 7168
        %v797 = vsel %vm796, %v795, %v794
        %v799 = vmul.f32 %v789, %v797
        %v800 = vadd.f32 %v799, 0.0
        %v801 = vstv %s451
        %v802 = vmul.f32 %v801, %v555
        %v803 = vadd.f32 %v802, 0.0
        %v804 = vstv %s500
        %v805 = vmul.f32 %v804, %v566
        %v806 = vadd.f32 %v805, 0.0
        %v807 = vstv %s458
        %v808 = vmul.f32 %v807, %v555
        %810 = vrot.lane.b32.xlu0 %v808, 112
        %v811 = vpop.permute.xlu0 %810
        %v812 = vrot.slane %v811, 1
        %v813 = vsel %vm562, %v811, %v812
        %v815 = vadd.f32 %v803, %v813
        %v816 = vstv %s507
        %v817 = vmul.f32 %v816, %v566
        %819 = vrot.lane.b32.xlu0 %v817, 112
        %v820 = vpop.permute.xlu0 %819
        %v821 = vrot.slane %v820, 1
        %v822 = vsel %vm562, %v820, %v821
        %v824 = vadd.f32 %v806, %v822
        %v825 = vstv %s465
        %v826 = vmul.f32 %v825, %v555
        %828 = vrot.lane.b32.xlu0 %v826, 96
        %v829 = vpop.permute.xlu0 %828
        %v830 = vrot.slane %v829, 1
        %v831 = vsel %vm582, %v829, %v830
        %v833 = vadd.f32 %v815, %v831
        %v834 = vstv %s514
        %v835 = vmul.f32 %v834, %v566
        %837 = vrot.lane.b32.xlu0 %v835, 96
        %v838 = vpop.permute.xlu0 %837
        %v839 = vrot.slane %v838, 1
        %v840 = vsel %vm582, %v838, %v839
        %v842 = vadd.f32 %v824, %v840
        %v843 = vstv %s472
        %v844 = vmul.f32 %v843, %v555
        %846 = vrot.lane.b32.xlu0 %v844, 80
        %v847 = vpop.permute.xlu0 %846
        %v848 = vrot.slane %v847, 1
        %v849 = vsel %vm601, %v847, %v848
        %v851 = vadd.f32 %v833, %v849
        %v852 = vstv %s521
        %v853 = vmul.f32 %v852, %v566
        %855 = vrot.lane.b32.xlu0 %v853, 80
        %v856 = vpop.permute.xlu0 %855
        %v857 = vrot.slane %v856, 1
        %v858 = vsel %vm601, %v856, %v857
        %v860 = vadd.f32 %v842, %v858
        %v861 = vstv %s479
        %v862 = vmul.f32 %v861, %v555
        %864 = vrot.lane.b32.xlu0 %v862, 64
        %v865 = vpop.permute.xlu0 %864
        %v866 = vrot.slane %v865, 1
        %v867 = vsel %vm620, %v865, %v866
        %v869 = vadd.f32 %v851, %v867
        %v870 = vstv %s528
        %v871 = vmul.f32 %v870, %v566
        %873 = vrot.lane.b32.xlu0 %v871, 64
        %v874 = vpop.permute.xlu0 %873
        %v875 = vrot.slane %v874, 1
        %v876 = vsel %vm620, %v874, %v875
        %v878 = vadd.f32 %v860, %v876
        %v879 = vstv %s486
        %v880 = vmul.f32 %v879, %v555
        %882 = vrot.lane.b32.xlu0 %v880, 48
        %v883 = vpop.permute.xlu0 %882
        %v884 = vrot.slane %v883, 1
        %v885 = vsel %vm639, %v883, %v884
        %v887 = vadd.f32 %v869, %v885
        %v888 = vstv %s535
        %v889 = vmul.f32 %v888, %v566
        %891 = vrot.lane.b32.xlu0 %v889, 48
        %v892 = vpop.permute.xlu0 %891
        %v893 = vrot.slane %v892, 1
        %v894 = vsel %vm639, %v892, %v893
        %v896 = vadd.f32 %v878, %v894
        %v897 = vstv %s493
        %v898 = vmul.f32 %v897, %v555
        %900 = vrot.lane.b32.xlu0 %v898, 32
        %v901 = vpop.permute.xlu0 %900
        %v902 = vrot.slane %v901, 1
        %v903 = vsel %vm658, %v901, %v902
        %v905 = vadd.f32 %v887, %v903
        %v906 = vstv %s542
        %v907 = vmul.f32 %v906, %v566
        %909 = vrot.lane.b32.xlu0 %v907, 32
        %v910 = vpop.permute.xlu0 %909
        %v911 = vrot.slane %v910, 1
        %v912 = vsel %vm658, %v910, %v911
        %v914 = vadd.f32 %v896, %v912
        %v915 = vadd.f32 %v905, %v914
        %s916 = scalar_lea.vmem %s3, 2
        %v917 = vld [vmem:[%s916] ss:$8 sm:$0x3]
        %919 = vrot.lane.b32.xlu0 %v917, 2
        %v920 = vpop.permute.xlu0 %919
        %v921 = vrot.slane %v920, 7
        %vm922 = vcmask 15360
        %v923 = vsel %vm922, %v921, %v920
        %v925 = vmul.f32 %v915, %v923
        %927 = vrot.lane.b32.xlu0 %v925, 126
        %v928 = vpop.permute.xlu0 %927
        %v929 = vrot.slane %v928, 1
        %vm930 = vcmask 1031168
        %v931 = vsel %vm930, %v928, %v929
        %v933 = vadd.f32 %v674, %v931
        %v934 = vstv %s452
        %v935 = vmul.f32 %v934, %v555
        %v936 = vadd.f32 %v935, 0.0
        %v937 = vstv %s501
        %v938 = vmul.f32 %v937, %v566
        %v939 = vadd.f32 %v938, 0.0
        %v940 = vstv %s459
        %v941 = vmul.f32 %v940, %v555
        %943 = vrot.lane.b32.xlu0 %v941, 112
        %v944 = vpop.permute.xlu0 %943
        %v945 = vrot.slane %v944, 1
        %v946 = vsel %vm562, %v944, %v945
        %v948 = vadd.f32 %v936, %v946
        %v949 = vstv %s508
        %v950 = vmul.f32 %v949, %v566
        %952 = vrot.lane.b32.xlu0 %v950, 112
        %v953 = vpop.permute.xlu0 %952
        %v954 = vrot.slane %v953, 1
        %v955 = vsel %vm562, %v953, %v954
        %v957 = vadd.f32 %v939, %v955
        %v958 = vstv %s466
        %v959 = vmul.f32 %v958, %v555
        %961 = vrot.lane.b32.xlu0 %v959, 96
        %v962 = vpop.permute.xlu0 %961
        %v963 = vrot.slane %v962, 1
        %v964 = vsel %vm582, %v962, %v963
        %v966 = vadd.f32 %v948, %v964
        %v967 = vstv %s515
        %v968 = vmul.f32 %v967, %v566
        %970 = vrot.lane.b32.xlu0 %v968, 96
        %v971 = vpop.permute.xlu0 %970
        %v972 = vrot.slane %v971, 1
        %v973 = vsel %vm582, %v971, %v972
        %v975 = vadd.f32 %v957, %v973
        %v976 = vstv %s473
        %v977 = vmul.f32 %v976, %v555
        %979 = vrot.lane.b32.xlu0 %v977, 80
        %v980 = vpop.permute.xlu0 %979
        %v981 = vrot.slane %v980, 1
        %v982 = vsel %vm601, %v980, %v981
        %v984 = vadd.f32 %v966, %v982
        %v985 = vstv %s522
        %v986 = vmul.f32 %v985, %v566
        %988 = vrot.lane.b32.xlu0 %v986, 80
        %v989 = vpop.permute.xlu0 %988
        %v990 = vrot.slane %v989, 1
        %v991 = vsel %vm601, %v989, %v990
        %v993 = vadd.f32 %v975, %v991
        %v994 = vstv %s480
        %v995 = vmul.f32 %v994, %v555
        %997 = vrot.lane.b32.xlu0 %v995, 64
        %v998 = vpop.permute.xlu0 %997
        %v999 = vrot.slane %v998, 1
        %v1000 = vsel %vm620, %v998, %v999
        %v1002 = vadd.f32 %v984, %v1000
        %v1003 = vstv %s529
        %v1004 = vmul.f32 %v1003, %v566
        %1006 = vrot.lane.b32.xlu0 %v1004, 64
        %v1007 = vpop.permute.xlu0 %1006
        %v1008 = vrot.slane %v1007, 1
        %v1009 = vsel %vm620, %v1007, %v1008
        %v1011 = vadd.f32 %v993, %v1009
        %v1012 = vstv %s487
        %v1013 = vmul.f32 %v1012, %v555
        %1015 = vrot.lane.b32.xlu0 %v1013, 48
        %v1016 = vpop.permute.xlu0 %1015
        %v1017 = vrot.slane %v1016, 1
        %v1018 = vsel %vm639, %v1016, %v1017
        %v1020 = vadd.f32 %v1002, %v1018
        %v1021 = vstv %s536
        %v1022 = vmul.f32 %v1021, %v566
        %1024 = vrot.lane.b32.xlu0 %v1022, 48
        %v1025 = vpop.permute.xlu0 %1024
        %v1026 = vrot.slane %v1025, 1
        %v1027 = vsel %vm639, %v1025, %v1026
        %v1029 = vadd.f32 %v1011, %v1027
        %v1030 = vstv %s494
        %v1031 = vmul.f32 %v1030, %v555
        %1033 = vrot.lane.b32.xlu0 %v1031, 32
        %v1034 = vpop.permute.xlu0 %1033
        %v1035 = vrot.slane %v1034, 1
        %v1036 = vsel %vm658, %v1034, %v1035
        %v1038 = vadd.f32 %v1020, %v1036
        %v1039 = vstv %s543
        %v1040 = vmul.f32 %v1039, %v566
        %1042 = vrot.lane.b32.xlu0 %v1040, 32
        %v1043 = vpop.permute.xlu0 %1042
        %v1044 = vrot.slane %v1043, 1
        %v1045 = vsel %vm658, %v1043, %v1044
        %v1047 = vadd.f32 %v1029, %v1045
        %v1048 = vadd.f32 %v1038, %v1047
        %1050 = vrot.lane.b32.xlu0 %v1048, 126
        %v1051 = vpop.permute.xlu0 %1050
        %v1052 = vrot.slane %v1051, 1
        %v1053 = vsel %vm930, %v1051, %v1052
        %v1055 = vadd.f32 %v800, %v1053
        %v1056 = vstv %s453
        %v1057 = vmul.f32 %v1056, %v555
        %v1058 = vadd.f32 %v1057, 0.0
        %v1059 = vstv %s502
        %v1060 = vmul.f32 %v1059, %v566
        %v1061 = vadd.f32 %v1060, 0.0
        %v1062 = vstv %s460
        %v1063 = vmul.f32 %v1062, %v555
        %1065 = vrot.lane.b32.xlu0 %v1063, 112
        %v1066 = vpop.permute.xlu0 %1065
        %v1067 = vrot.slane %v1066, 1
        %v1068 = vsel %vm562, %v1066, %v1067
        %v1070 = vadd.f32 %v1058, %v1068
        %v1071 = vstv %s509
        %v1072 = vmul.f32 %v1071, %v566
        %1074 = vrot.lane.b32.xlu0 %v1072, 112
        %v1075 = vpop.permute.xlu0 %1074
        %v1076 = vrot.slane %v1075, 1
        %v1077 = vsel %vm562, %v1075, %v1076
        %v1079 = vadd.f32 %v1061, %v1077
        %v1080 = vstv %s467
        %v1081 = vmul.f32 %v1080, %v555
        %1083 = vrot.lane.b32.xlu0 %v1081, 96
        %v1084 = vpop.permute.xlu0 %1083
        %v1085 = vrot.slane %v1084, 1
        %v1086 = vsel %vm582, %v1084, %v1085
        %v1088 = vadd.f32 %v1070, %v1086
        %v1089 = vstv %s516
        %v1090 = vmul.f32 %v1089, %v566
        %1092 = vrot.lane.b32.xlu0 %v1090, 96
        %v1093 = vpop.permute.xlu0 %1092
        %v1094 = vrot.slane %v1093, 1
        %v1095 = vsel %vm582, %v1093, %v1094
        %v1097 = vadd.f32 %v1079, %v1095
        %v1098 = vstv %s474
        %v1099 = vmul.f32 %v1098, %v555
        %1101 = vrot.lane.b32.xlu0 %v1099, 80
        %v1102 = vpop.permute.xlu0 %1101
        %v1103 = vrot.slane %v1102, 1
        %v1104 = vsel %vm601, %v1102, %v1103
        %v1106 = vadd.f32 %v1088, %v1104
        %v1107 = vstv %s523
        %v1108 = vmul.f32 %v1107, %v566
        %1110 = vrot.lane.b32.xlu0 %v1108, 80
        %v1111 = vpop.permute.xlu0 %1110
        %v1112 = vrot.slane %v1111, 1
        %v1113 = vsel %vm601, %v1111, %v1112
        %v1115 = vadd.f32 %v1097, %v1113
        %v1116 = vstv %s481
        %v1117 = vmul.f32 %v1116, %v555
        %1119 = vrot.lane.b32.xlu0 %v1117, 64
        %v1120 = vpop.permute.xlu0 %1119
        %v1121 = vrot.slane %v1120, 1
        %v1122 = vsel %vm620, %v1120, %v1121
        %v1124 = vadd.f32 %v1106, %v1122
        %v1125 = vstv %s530
        %v1126 = vmul.f32 %v1125, %v566
        %1128 = vrot.lane.b32.xlu0 %v1126, 64
        %v1129 = vpop.permute.xlu0 %1128
        %v1130 = vrot.slane %v1129, 1
        %v1131 = vsel %vm620, %v1129, %v1130
        %v1133 = vadd.f32 %v1115, %v1131
        %v1134 = vstv %s488
        %v1135 = vmul.f32 %v1134, %v555
        %1137 = vrot.lane.b32.xlu0 %v1135, 48
        %v1138 = vpop.permute.xlu0 %1137
        %v1139 = vrot.slane %v1138, 1
        %v1140 = vsel %vm639, %v1138, %v1139
        %v1142 = vadd.f32 %v1124, %v1140
        %v1143 = vstv %s537
        %v1144 = vmul.f32 %v1143, %v566
        %1146 = vrot.lane.b32.xlu0 %v1144, 48
        %v1147 = vpop.permute.xlu0 %1146
        %v1148 = vrot.slane %v1147, 1
        %v1149 = vsel %vm639, %v1147, %v1148
        %v1151 = vadd.f32 %v1133, %v1149
        %v1152 = vstv %s495
        %v1153 = vmul.f32 %v1152, %v555
        %1155 = vrot.lane.b32.xlu0 %v1153, 32
        %v1156 = vpop.permute.xlu0 %1155
        %v1157 = vrot.slane %v1156, 1
        %v1158 = vsel %vm658, %v1156, %v1157
        %v1160 = vadd.f32 %v1142, %v1158
        %v1161 = vstv %s544
        %v1162 = vmul.f32 %v1161, %v566
        %1164 = vrot.lane.b32.xlu0 %v1162, 32
        %v1165 = vpop.permute.xlu0 %1164
        %v1166 = vrot.slane %v1165, 1
        %v1167 = vsel %vm658, %v1165, %v1166
        %v1169 = vadd.f32 %v1151, %v1167
        %v1170 = vadd.f32 %v1160, %v1169
        %s1171 = scalar_lea.vmem %s3, 4
        %v1172 = vld [vmem:[%s1171] ss:$8 sm:$0x3]
        %1174 = vrot.lane.b32.xlu0 %v1172, 4
        %v1175 = vpop.permute.xlu0 %1174
        %v1176 = vrot.slane %v1175, 7
        %v1177 = vsel %vm260, %v1176, %v1175
        %v1179 = vmul.f32 %v1170, %v1177
        %1181 = vrot.lane.b32.xlu0 %v1179, 124
        %v1182 = vpop.permute.xlu0 %1181
        %v1183 = vrot.slane %v1182, 1
        %vm1184 = vcmask 1014784
        %v1185 = vsel %vm1184, %v1182, %v1183
        %v1187 = vadd.f32 %v933, %v1185
        %v1188 = vstv %s454
        %v1189 = vmul.f32 %v1188, %v555
        %v1190 = vadd.f32 %v1189, 0.0
        %v1191 = vstv %s503
        %v1192 = vmul.f32 %v1191, %v566
        %v1193 = vadd.f32 %v1192, 0.0
        %v1194 = vstv %s461
        %v1195 = vmul.f32 %v1194, %v555
        %1197 = vrot.lane.b32.xlu0 %v1195, 112
        %v1198 = vpop.permute.xlu0 %1197
        %v1199 = vrot.slane %v1198, 1
        %v1200 = vsel %vm562, %v1198, %v1199
        %v1202 = vadd.f32 %v1190, %v1200
        %v1203 = vstv %s510
        %v1204 = vmul.f32 %v1203, %v566
        %1206 = vrot.lane.b32.xlu0 %v1204, 112
        %v1207 = vpop.permute.xlu0 %1206
        %v1208 = vrot.slane %v1207, 1
        %v1209 = vsel %vm562, %v1207, %v1208
        %v1211 = vadd.f32 %v1193, %v1209
        %v1212 = vstv %s468
        %v1213 = vmul.f32 %v1212, %v555
        %1215 = vrot.lane.b32.xlu0 %v1213, 96
        %v1216 = vpop.permute.xlu0 %1215
        %v1217 = vrot.slane %v1216, 1
        %v1218 = vsel %vm582, %v1216, %v1217
        %v1220 = vadd.f32 %v1202, %v1218
        %v1221 = vstv %s517
        %v1222 = vmul.f32 %v1221, %v566
        %1224 = vrot.lane.b32.xlu0 %v1222, 96
        %v1225 = vpop.permute.xlu0 %1224
        %v1226 = vrot.slane %v1225, 1
        %v1227 = vsel %vm582, %v1225, %v1226
        %v1229 = vadd.f32 %v1211, %v1227
        %v1230 = vstv %s475
        %v1231 = vmul.f32 %v1230, %v555
        %1233 = vrot.lane.b32.xlu0 %v1231, 80
        %v1234 = vpop.permute.xlu0 %1233
        %v1235 = vrot.slane %v1234, 1
        %v1236 = vsel %vm601, %v1234, %v1235
        %v1238 = vadd.f32 %v1220, %v1236
        %v1239 = vstv %s524
        %v1240 = vmul.f32 %v1239, %v566
        %1242 = vrot.lane.b32.xlu0 %v1240, 80
        %v1243 = vpop.permute.xlu0 %1242
        %v1244 = vrot.slane %v1243, 1
        %v1245 = vsel %vm601, %v1243, %v1244
        %v1247 = vadd.f32 %v1229, %v1245
        %v1248 = vstv %s482
        %v1249 = vmul.f32 %v1248, %v555
        %1251 = vrot.lane.b32.xlu0 %v1249, 64
        %v1252 = vpop.permute.xlu0 %1251
        %v1253 = vrot.slane %v1252, 1
        %v1254 = vsel %vm620, %v1252, %v1253
        %v1256 = vadd.f32 %v1238, %v1254
        %v1257 = vstv %s531
        %v1258 = vmul.f32 %v1257, %v566
        %1260 = vrot.lane.b32.xlu0 %v1258, 64
        %v1261 = vpop.permute.xlu0 %1260
        %v1262 = vrot.slane %v1261, 1
        %v1263 = vsel %vm620, %v1261, %v1262
        %v1265 = vadd.f32 %v1247, %v1263
        %v1266 = vstv %s489
        %v1267 = vmul.f32 %v1266, %v555
        %1269 = vrot.lane.b32.xlu0 %v1267, 48
        %v1270 = vpop.permute.xlu0 %1269
        %v1271 = vrot.slane %v1270, 1
        %v1272 = vsel %vm639, %v1270, %v1271
        %v1274 = vadd.f32 %v1256, %v1272
        %v1275 = vstv %s538
        %v1276 = vmul.f32 %v1275, %v566
        %1278 = vrot.lane.b32.xlu0 %v1276, 48
        %v1279 = vpop.permute.xlu0 %1278
        %v1280 = vrot.slane %v1279, 1
        %v1281 = vsel %vm639, %v1279, %v1280
        %v1283 = vadd.f32 %v1265, %v1281
        %v1284 = vstv %s496
        %v1285 = vmul.f32 %v1284, %v555
        %1287 = vrot.lane.b32.xlu0 %v1285, 32
        %v1288 = vpop.permute.xlu0 %1287
        %v1289 = vrot.slane %v1288, 1
        %v1290 = vsel %vm658, %v1288, %v1289
        %v1292 = vadd.f32 %v1274, %v1290
        %v1293 = vstv %s545
        %v1294 = vmul.f32 %v1293, %v566
        %1296 = vrot.lane.b32.xlu0 %v1294, 32
        %v1297 = vpop.permute.xlu0 %1296
        %v1298 = vrot.slane %v1297, 1
        %v1299 = vsel %vm658, %v1297, %v1298
        %v1301 = vadd.f32 %v1283, %v1299
        %v1302 = vadd.f32 %v1292, %v1301
        %s1303 = scalar_lea.vmem %s3, 5
        %v1304 = vld [vmem:[%s1303] ss:$8 sm:$0x3]
        %1306 = vrot.lane.b32.xlu0 %v1304, 5
        %v1307 = vpop.permute.xlu0 %1306
        %v1308 = vrot.slane %v1307, 7
        %vm1309 = vcmask 39936
        %v1310 = vsel %vm1309, %v1308, %v1307
        %v1312 = vmul.f32 %v1302, %v1310
        %1314 = vrot.lane.b32.xlu0 %v1312, 124
        %v1315 = vpop.permute.xlu0 %1314
        %v1316 = vrot.slane %v1315, 1
        %v1317 = vsel %vm1184, %v1315, %v1316
        %v1319 = vadd.f32 %v1055, %v1317
        %v1320 = vstv %s455
        %v1321 = vmul.f32 %v1320, %v555
        %v1322 = vadd.f32 %v1321, 0.0
        %v1323 = vstv %s504
        %v1324 = vmul.f32 %v1323, %v566
        %v1325 = vadd.f32 %v1324, 0.0
        %v1326 = vstv %s462
        %v1327 = vmul.f32 %v1326, %v555
        %1329 = vrot.lane.b32.xlu0 %v1327, 112
        %v1330 = vpop.permute.xlu0 %1329
        %v1331 = vrot.slane %v1330, 1
        %v1332 = vsel %vm562, %v1330, %v1331
        %v1334 = vadd.f32 %v1322, %v1332
        %v1335 = vstv %s511
        %v1336 = vmul.f32 %v1335, %v566
        %1338 = vrot.lane.b32.xlu0 %v1336, 112
        %v1339 = vpop.permute.xlu0 %1338
        %v1340 = vrot.slane %v1339, 1
        %v1341 = vsel %vm562, %v1339, %v1340
        %v1343 = vadd.f32 %v1325, %v1341
        %v1344 = vstv %s469
        %v1345 = vmul.f32 %v1344, %v555
        %1347 = vrot.lane.b32.xlu0 %v1345, 96
        %v1348 = vpop.permute.xlu0 %1347
        %v1349 = vrot.slane %v1348, 1
        %v1350 = vsel %vm582, %v1348, %v1349
        %v1352 = vadd.f32 %v1334, %v1350
        %v1353 = vstv %s518
        %v1354 = vmul.f32 %v1353, %v566
        %1356 = vrot.lane.b32.xlu0 %v1354, 96
        %v1357 = vpop.permute.xlu0 %1356
        %v1358 = vrot.slane %v1357, 1
        %v1359 = vsel %vm582, %v1357, %v1358
        %v1361 = vadd.f32 %v1343, %v1359
        %v1362 = vstv %s476
        %v1363 = vmul.f32 %v1362, %v555
        %1365 = vrot.lane.b32.xlu0 %v1363, 80
        %v1366 = vpop.permute.xlu0 %1365
        %v1367 = vrot.slane %v1366, 1
        %v1368 = vsel %vm601, %v1366, %v1367
        %v1370 = vadd.f32 %v1352, %v1368
        %v1371 = vstv %s525
        %v1372 = vmul.f32 %v1371, %v566
        %1374 = vrot.lane.b32.xlu0 %v1372, 80
        %v1375 = vpop.permute.xlu0 %1374
        %v1376 = vrot.slane %v1375, 1
        %v1377 = vsel %vm601, %v1375, %v1376
        %v1379 = vadd.f32 %v1361, %v1377
        %v1380 = vstv %s483
        %v1381 = vmul.f32 %v1380, %v555
        %1383 = vrot.lane.b32.xlu0 %v1381, 64
        %v1384 = vpop.permute.xlu0 %1383
        %v1385 = vrot.slane %v1384, 1
        %v1386 = vsel %vm620, %v1384, %v1385
        %v1388 = vadd.f32 %v1370, %v1386
        %v1389 = vstv %s532
        %v1390 = vmul.f32 %v1389, %v566
        %1392 = vrot.lane.b32.xlu0 %v1390, 64
        %v1393 = vpop.permute.xlu0 %1392
        %v1394 = vrot.slane %v1393, 1
        %v1395 = vsel %vm620, %v1393, %v1394
        %v1397 = vadd.f32 %v1379, %v1395
        %v1398 = vstv %s490
        %v1399 = vmul.f32 %v1398, %v555
        %1401 = vrot.lane.b32.xlu0 %v1399, 48
        %v1402 = vpop.permute.xlu0 %1401
        %v1403 = vrot.slane %v1402, 1
        %v1404 = vsel %vm639, %v1402, %v1403
        %v1406 = vadd.f32 %v1388, %v1404
        %v1407 = vstv %s539
        %v1408 = vmul.f32 %v1407, %v566
        %1410 = vrot.lane.b32.xlu0 %v1408, 48
        %v1411 = vpop.permute.xlu0 %1410
        %v1412 = vrot.slane %v1411, 1
        %v1413 = vsel %vm639, %v1411, %v1412
        %v1415 = vadd.f32 %v1397, %v1413
        %v1416 = vstv %s497
        %v1417 = vmul.f32 %v1416, %v555
        %1419 = vrot.lane.b32.xlu0 %v1417, 32
        %v1420 = vpop.permute.xlu0 %1419
        %v1421 = vrot.slane %v1420, 1
        %v1422 = vsel %vm658, %v1420, %v1421
        %v1424 = vadd.f32 %v1406, %v1422
        %v1425 = vstv %s546
        %v1426 = vmul.f32 %v1425, %v566
        %1428 = vrot.lane.b32.xlu0 %v1426, 32
        %v1429 = vpop.permute.xlu0 %1428
        %v1430 = vrot.slane %v1429, 1
        %v1431 = vsel %vm658, %v1429, %v1430
        %v1433 = vadd.f32 %v1415, %v1431
        %v1434 = vadd.f32 %v1424, %v1433
        %s1435 = scalar_lea.vmem %s3, 6
        %v1436 = vld [vmem:[%s1435] ss:$8 sm:$0x3]
        %1438 = vrot.lane.b32.xlu0 %v1436, 6
        %v1439 = vpop.permute.xlu0 %1438
        %v1440 = vrot.slane %v1439, 7
        %vm1441 = vcmask 48128
        %v1442 = vsel %vm1441, %v1440, %v1439
        %v1444 = vmul.f32 %v1434, %v1442
        %1446 = vrot.lane.b32.xlu0 %v1444, 122
        %v1447 = vpop.permute.xlu0 %1446
        %v1448 = vrot.slane %v1447, 1
        %vm1449 = vcmask 998400
        %v1450 = vsel %vm1449, %v1447, %v1448
        %v1452 = vadd.f32 %v1187, %v1450
        %1454 = vrot.lane.b32.xlu0 %v1319, 127
        %v1455 = vpop.permute.xlu0 %1454
        %v1456 = vrot.slane %v1455, 1
        %vm1457 = vcmask 1039360
        %v1458 = vsel %vm1457, %v1455, %v1456
        %v1460 = vadd.f32 %v1452, %v1458
        %v1461 = vxor.u32 %v1460, 2147483648
        %v1462 = vmul.f32 %v1461, 1.442695
        %v1463 = vpow.pop %v1462
        %v1464 = vadd.f32 %v1463, 1.0
        %v1465 = vrcp.pop %v1464
        %v1466 = vmul.f32 1.0, %v1465
        %v1468 = vlaneseq
        %v1469 = vshrl.u32 %v1468, 7
        %v1470 = vsub.s32 0, %v1469
        %v1471 = vrot.slane %v1466, %v1470
        %v1472 = vlaneseq
        %v1473 = vshrl.u32 %v1472, 7
        %v1474 = vsub.s32 1, %v1473
        %v1475 = vrot.slane %v1466, %v1474
        %v1476 = vcombine.low %v1471, %v1475
        %v1478 = vmul.f32 %v358, %v1476
        %1479 = vst [vmem:[%s238] sm:$0xff] %v1478
        %p1480 = scmp.lt.s32.totalorder %s17, 1
        %s1481 = scalar_select %p1480, %s17, 1
        %s1482 = smul.addr %s1481, 2
        %s1483 = smul.addr %s1482, 4
        %s1484 = scalar_lea.vmem %s5, %s1483
        // Predicated region
        $region45: #{cbam_pallas.1} parent=39 // pred_check
          %p1485 = pneg %p145
        $region46: #{cbam_pallas.1} parent=39 // pred_check_branch
          %1487 = sbr.rel (%p1485) target = $region48
        $region47: #{cbam_pallas.1} parent=39 // pred_region
          _
        $region48: #{cbam_pallas.1} parent=39 // pred_fallthru
          _
      $region40: #{cbam_pallas.1} parent=5 // pred_fallthru
        _
      %p1488 = scmp.le.s32.totalorder 2, %s12
      // Predicated region
      $region49: #{cbam_pallas.1} parent=5 // pred_check
        %p1489 = pneg %p1488
      $region50: #{cbam_pallas.1} parent=5 // pred_check_branch
        %1491 = sbr.rel (%p1489) target = $region52
      $region51: #{cbam_pallas.1} parent=5 // pred_region
        %s1492 = ssub.s32 %s12, 2
        // Predicated region
        $region53: #{cbam_pallas.1} parent=51 // pred_check
          %p1493 = pneg %p151
        $region54: #{cbam_pallas.1} parent=51 // pred_check_branch
          %1495 = sbr.rel (%p1493) target = $region56
        $region55: #{cbam_pallas.1} parent=51 // pred_region
          %p1496 = scmp.lt.s32.totalorder %s18, 1
          %s1497 = scalar_select %p1496, %s18, 1
          %s1498 = smul.addr %s1497, 2
          %s1499 = smul.addr %s1498, 4
          %s1500 = scalar_lea.vmem %s5, %s1499
        $region56: #{cbam_pallas.1} parent=51 // pred_fallthru
          _
      $region52: #{cbam_pallas.1} parent=5 // pred_fallthru
        _
    $region6: #{cbam_pallas.1} parent=1 // loop_footer
      %s16 = sadd.s32 1, %s12
    $region7: #{cbam_pallas.1} parent=1 // loop_footer_branch
      %11 = sbr.rel target = $region3
    $region8: #{cbam_pallas.1} parent=1 // loop_exit
      _
    %1501 = vsyncpa [#allocation5], 1
    %s1502 = scalar_lea.sflag [#allocation5], 1
    %1503 = vsyncpa %s1502, 1

</llo_original>
